<compile_context>
chip_gen: v7x
topology: tpu7x:2x2x1
jax: 0.10.0
libtpu: 0.0.40
codegen_flags: <defaults>
</compile_context>

<pallas_src>
import jax
import jax.numpy as jnp
from jax.experimental import pallas as pl
from jax.experimental.pallas import tpu as pltpu

# ---- module-consistent shapes ----
INPUT_DIM = 32            # "input_dim" (image-feature part)
GRAD_DIM = 32             # "grad_dim"  (gradient part)
IN_TOTAL = INPUT_DIM + GRAD_DIM
N_CLASSES = 8
H1, H2, H3 = 512, 256, 128    # fc1/fc2/fc3 widths
GH1, GH2 = 256, 128           # grad_fc1/grad_fc2 widths
OUT_PAD = 128                 # lane-dense padded fc4 output width
TILE_B_MAX = 1024             # max batch rows per grid step


def _round_up(x, m):
    return ((x + m - 1) // m) * m


def _choose_tile(batch):
    """Pick a batch tile: as large as possible (amortize the ~0.35 µs per-step
    pipeline overhead) while keeping >=2 grid steps for medium batches so the
    'parallel' batch axis can shard across v7x's 2 TensorCores."""
    b8 = _round_up(batch, 8)
    if b8 <= 512:
        return b8                               # single step, tiny batch
    if b8 <= TILE_B_MAX:
        return _round_up((b8 + 1) // 2, 8)      # 2 steps
    return TILE_B_MAX


def _attack_kernel(x_ref,
                   w_in_ref, b_in_ref,
                   w2_ref, b2_ref,
                   w3_ref, b3_ref,
                   gw2_ref, gb2_ref,
                   w4_ref, b4_ref,
                   out_ref,
                   cat_ref):
    """One TILE_B-row tile of the GradientAttackModel forward."""
    xb = x_ref[...].astype(jnp.bfloat16)                       # (TB, 64), no-op if x is bf16

    # fused fc1 + grad_fc1 (block-diagonal weights) -> bias + relu, downcast in epilogue
    h0 = jnp.dot(xb, w_in_ref[...], preferred_element_type=jnp.float32)
    h0 = jnp.maximum(h0 + b_in_ref[...], 0.0).astype(jnp.bfloat16)   # (TB, 768)
    hf = h0[:, :H1]                                             # (TB, 512) lane-aligned slice
    hg = h0[:, H1:]                                             # (TB, 256) lane-aligned slice

    # fc2 -> relu   (dropout = identity in eval mode)
    h2 = jnp.dot(hf, w2_ref[...], preferred_element_type=jnp.float32)
    h2 = jnp.maximum(h2 + b2_ref[...], 0.0).astype(jnp.bfloat16)     # (TB, 256)

    # fc3 and grad_fc2 as two separate (K=256, N=128) matmuls, written directly
    # into the fc4-input scratch (lane offsets 0 / 128) — no concatenate copy.
    h3 = jnp.dot(h2, w3_ref[...], preferred_element_type=jnp.float32)
    cat_ref[:, :H3] = jnp.maximum(h3 + b3_ref[...], 0.0).astype(jnp.bfloat16)
    g2 = jnp.dot(hg, gw2_ref[...], preferred_element_type=jnp.float32)
    cat_ref[:, H3:] = jnp.maximum(g2 + gb2_ref[...], 0.0).astype(jnp.bfloat16)

    # fc4 — output padded to 128 lanes for an unmasked, lane-dense store
    out = jnp.dot(cat_ref[...], w4_ref[...], preferred_element_type=jnp.float32)
    out_ref[...] = (out + b4_ref[...]).astype(out_ref.dtype)


def gradient_attack_forward(x, packed, out_dtype=jnp.bfloat16):
    """x: (B, IN_TOTAL) f32 or bf16.  packed: params from pack_params()."""
    B = x.shape[0]
    tile = _choose_tile(B)
    b_pad = _round_up(B, tile)
    if b_pad != B:
        x = jnp.pad(x, ((0, b_pad - B), (0, 0)))
    n_tiles = b_pad // tile

    def resident(arr):
        # Full-array block, constant block index -> fetched once, stays VMEM
        # resident across all grid steps; single-buffered (it never changes).
        return pl.BlockSpec(arr.shape, lambda i: (0, 0),
                            pipeline_mode=pl.Buffered(1))

    args = (x, *packed)
    in_specs = [pl.BlockSpec((tile, IN_TOTAL), lambda i: (i, 0))]
    in_specs += [resident(a) for a in packed]

    flops = 2 * b_pad * (IN_TOTAL * (H1 + GH1) + H1 * H2
                         + H2 * H3 + GH1 * GH2 + (H3 + GH2) * OUT_PAD)
    bytes_accessed = sum(int(a.size) * a.dtype.itemsize for a in args)
    bytes_accessed += b_pad * OUT_PAD * jnp.dtype(out_dtype).itemsize

    out = pl.pallas_call(
        _attack_kernel,
        out_shape=jax.ShapeDtypeStruct((b_pad, OUT_PAD), out_dtype),
        grid_spec=pltpu.PrefetchScalarGridSpec(
            num_scalar_prefetch=0,
            grid=(n_tiles,),
            in_specs=in_specs,
            out_specs=pl.BlockSpec((tile, OUT_PAD), lambda i: (i, 0)),
            scratch_shapes=[pltpu.VMEM((tile, H3 + GH2), jnp.bfloat16)],
        ),
        compiler_params=pltpu.CompilerParams(
            # TODO(synk): on v7x, pltpu.CORE_PARALLEL on this axis may be needed
            # for 2-TensorCore sharding if plain "parallel" does not shard.
            dimension_semantics=("parallel",)),
        cost_estimate=pl.CostEstimate(
            flops=flops, transcendentals=0, bytes_accessed=bytes_accessed),
    )(*args)
    return out[:B, :N_CLASSES]


def init_params(key):
    """Deterministic synthetic parameters (uniform, PyTorch-Linear-like scale).

    Stored (in_features, out_features) so x @ W + b == PyTorch's x @ W.T + b.
    """
    def linear(k, fan_in, fan_out):
        kw, kb = jax.random.split(k)
        bound = 1.0 / jnp.sqrt(fan_in)
        w = jax.random.uniform(kw, (fan_in, fan_out), jnp.float32, -bound, bound)
        b = jax.random.uniform(kb, (1, fan_out), jnp.float32, -bound, bound)
        return w, b

    ks = jax.random.split(key, 6)
    return {
        "fc1": linear(ks[0], INPUT_DIM, H1),
        "fc2": linear(ks[1], H1, H2),
        "fc3": linear(ks[2], H2, H3),
        "grad_fc1": linear(ks[3], GRAD_DIM, GH1),
        "grad_fc2": linear(ks[4], GH1, GH2),
        "fc4": linear(ks[5], H3 + GH2, N_CLASSES),
    }


def pack_params(p):
    """Build the fused / lane-padded bf16 weights (f32 biases) the kernel uses."""
    (w1, b1), (w2, b2), (w3, b3) = p["fc1"], p["fc2"], p["fc3"]
    (gw1, gb1), (gw2, gb2) = p["grad_fc1"], p["grad_fc2"]
    (w4, b4) = p["fc4"]

    # [x | grad] @ [[w1, 0], [0, gw1]]  ==  [fc1(x) | grad_fc1(grad)]
    w_in = jnp.zeros((IN_TOTAL, H1 + GH1), jnp.float32)
    w_in = w_in.at[:INPUT_DIM, :H1].set(w1)
    w_in = w_in.at[INPUT_DIM:, H1:].set(gw1)
    b_in = jnp.concatenate([b1, gb1], axis=-1)

    # fc4 padded to 128 output lanes (extra columns are zero, sliced off later)
    w4p = jnp.zeros((H3 + GH2, OUT_PAD), jnp.float32).at[:, :N_CLASSES].set(w4)
    b4p = jnp.zeros((1, OUT_PAD), jnp.float32).at[:, :N_CLASSES].set(b4)

    bf = jnp.bfloat16
    return [w_in.astype(bf), b_in,
            w2.astype(bf), b2,
            w3.astype(bf), b3,
            gw2.astype(bf), gb2,
            w4p.astype(bf), b4p]


def reference_forward(x, p, weight_dtype=jnp.float32):
    """Pure-JAX reference matching the PyTorch forward (eval-mode dropout).

    weight_dtype=bfloat16 mirrors the kernel's mixed-precision policy.
    """
    def lin(a, w, b):
        return jnp.dot(a.astype(weight_dtype), w.astype(weight_dtype),
                       preferred_element_type=jnp.float32) + b

    (w1, b1), (w2, b2), (w3, b3) = p["fc1"], p["fc2"], p["fc3"]
    (gw1, gb1), (gw2, gb2) = p["grad_fc1"], p["grad_fc2"]
    (w4, b4) = p["fc4"]
    xi, g = x[:, :INPUT_DIM], x[:, INPUT_DIM:]
    h = jnp.maximum(lin(xi, w1, b1), 0.0)
    h = jnp.maximum(lin(h, w2, b2), 0.0)
    h = jnp.maximum(lin(h, w3, b3), 0.0)
    gh = jnp.maximum(lin(g, gw1, gb1), 0.0)
    gh = jnp.maximum(lin(gh, gw2, gb2), 0.0)
    return lin(jnp.concatenate([h, gh], axis=-1), w4, b4)


if __name__ == "__main__":
    key = jax.random.PRNGKey(0)
    kx, kp = jax.random.split(key)

    B = 203  # non-multiple of 8: exercises batch padding
    x = jax.random.normal(kx, (B, IN_TOTAL), jnp.float32)
    params = init_params(kp)
    packed = pack_params(params)

    out = gradient_attack_forward(x, packed)          # bf16 logits
    out = jax.block_until_ready(out)
    assert out.shape == (B, N_CLASSES), out.shape
    out_f32 = out.astype(jnp.float32)

    # Check against a reference using the same bf16-weight mixed precision
    # (kernel additionally rounds its output to bf16).
    ref_bf16 = reference_forward(x, params, jnp.bfloat16)
    err_bf16 = jnp.max(jnp.abs(out_f32 - ref_bf16))
    assert err_bf16 < 3e-2, f"max abs err vs bf16 ref: {err_bf16}"

    # Looser sanity check against full-precision (f32) PyTorch semantics.
    ref_f32 = reference_forward(x, params, jnp.float32)
    err_f32 = jnp.max(jnp.abs(out_f32 - ref_f32))
    assert err_f32 < 1e-1, f"max abs err vs f32 ref: {err_f32}"

    print("KERNEL_OK")
</pallas_src>

<mosaic_0001>
module attributes {stable_mosaic.version = 11 : i64} {
  func.func @_attack_kernel(%arg0: i32, %arg1: memref<208x64xf32, #tpu.memory_space<vmem>>, %arg2: memref<64x768xbf16, #tpu.memory_space<vmem>>, %arg3: memref<1x768xf32, #tpu.memory_space<vmem>>, %arg4: memref<512x256xbf16, #tpu.memory_space<vmem>>, %arg5: memref<1x256xf32, #tpu.memory_space<vmem>>, %arg6: memref<256x128xbf16, #tpu.memory_space<vmem>>, %arg7: memref<1x128xf32, #tpu.memory_space<vmem>>, %arg8: memref<256x128xbf16, #tpu.memory_space<vmem>>, %arg9: memref<1x128xf32, #tpu.memory_space<vmem>>, %arg10: memref<256x128xbf16, #tpu.memory_space<vmem>>, %arg11: memref<1x128xf32, #tpu.memory_space<vmem>>, %arg12: memref<208x128xbf16, #tpu.memory_space<vmem>>, %arg13: memref<208x256xbf16, #tpu.memory_space<vmem>>) attributes {dimension_semantics = [#tpu.dimension_semantics<parallel>], iteration_bounds = array<i64: 1>, scalar_prefetch = 0 : i64, scratch_operands = 1 : i64, tpu.core_type = #tpu.core_type<tc>, window_params = [{transform_indices = @transform_0, window_bounds = array<i64: 208, 64>}, {pipeline_mode = #tpu.pipeline_mode<synchronous>, transform_indices = @transform_1, window_bounds = array<i64: 64, 768>}, {pipeline_mode = #tpu.pipeline_mode<synchronous>, transform_indices = @transform_2, window_bounds = array<i64: 1, 768>}, {pipeline_mode = #tpu.pipeline_mode<synchronous>, transform_indices = @transform_3, window_bounds = array<i64: 512, 256>}, {pipeline_mode = #tpu.pipeline_mode<synchronous>, transform_indices = @transform_4, window_bounds = array<i64: 1, 256>}, {pipeline_mode = #tpu.pipeline_mode<synchronous>, transform_indices = @transform_5, window_bounds = array<i64: 256, 128>}, {pipeline_mode = #tpu.pipeline_mode<synchronous>, transform_indices = @transform_6, window_bounds = array<i64: 1, 128>}, {pipeline_mode = #tpu.pipeline_mode<synchronous>, transform_indices = @transform_7, window_bounds = array<i64: 256, 128>}, {pipeline_mode = #tpu.pipeline_mode<synchronous>, transform_indices = @transform_8, window_bounds = array<i64: 1, 128>}, {pipeline_mode = #tpu.pipeline_mode<synchronous>, transform_indices = @transform_9, window_bounds = array<i64: 256, 128>}, {pipeline_mode = #tpu.pipeline_mode<synchronous>, transform_indices = @transform_10, window_bounds = array<i64: 1, 128>}, {transform_indices = @transform_11, window_bounds = array<i64: 208, 128>}]} {
    %c0 = arith.constant 0 : index
    %c0_0 = arith.constant 0 : index
    %0 = vector.load %arg1[%c0, %c0_0] : memref<208x64xf32, #tpu.memory_space<vmem>>, vector<208x64xf32>
    %1 = arith.truncf %0 : vector<208x64xf32> to vector<208x64xbf16>
    %c0_1 = arith.constant 0 : index
    %c0_2 = arith.constant 0 : index
    %2 = vector.load %arg2[%c0_1, %c0_2] : memref<64x768xbf16, #tpu.memory_space<vmem>>, vector<64x768xbf16>
    %cst = arith.constant dense<0.000000e+00> : vector<208x768xf32>
    %3 = tpu.matmul %1, %2, %cst {dimension_numbers = #tpu.dot_dimension_numbers<[1], [0], [0], [1], [0, 0, 1, 1], [], []>} : vector<208x64xbf16>, vector<64x768xbf16>, vector<208x768xf32> -> vector<208x768xf32>
    %c0_3 = arith.constant 0 : index
    %c0_4 = arith.constant 0 : index
    %4 = vector.load %arg3[%c0_3, %c0_4] : memref<1x768xf32, #tpu.memory_space<vmem>>, vector<1x768xf32>
    %5 = vector.broadcast %4 : vector<1x768xf32> to vector<208x768xf32>
    %6 = arith.addf %3, %5 : vector<208x768xf32>
    %cst_5 = arith.constant 0.000000e+00 : f32
    %7 = vector.broadcast %cst_5 : f32 to vector<208x768xf32>
    %8 = arith.maximumf %6, %7 : vector<208x768xf32>
    %9 = arith.truncf %8 : vector<208x768xf32> to vector<208x768xbf16>
    %10 = vector.extract_strided_slice %9 {offsets = [0, 0], sizes = [208, 512], strides = [1, 1]} : vector<208x768xbf16> to vector<208x512xbf16>
    %11 = vector.extract_strided_slice %9 {offsets = [0, 512], sizes = [208, 256], strides = [1, 1]} : vector<208x768xbf16> to vector<208x256xbf16>
    %c0_6 = arith.constant 0 : index
    %c0_7 = arith.constant 0 : index
    %12 = vector.load %arg4[%c0_6, %c0_7] : memref<512x256xbf16, #tpu.memory_space<vmem>>, vector<512x256xbf16>
    %cst_8 = arith.constant dense<0.000000e+00> : vector<208x256xf32>
    %13 = tpu.matmul %10, %12, %cst_8 {dimension_numbers = #tpu.dot_dimension_numbers<[1], [0], [0], [1], [0, 0, 1, 1], [], []>} : vector<208x512xbf16>, vector<512x256xbf16>, vector<208x256xf32> -> vector<208x256xf32>
    %c0_9 = arith.constant 0 : index
    %c0_10 = arith.constant 0 : index
    %14 = vector.load %arg5[%c0_9, %c0_10] : memref<1x256xf32, #tpu.memory_space<vmem>>, vector<1x256xf32>
    %15 = vector.broadcast %14 : vector<1x256xf32> to vector<208x256xf32>
    %16 = arith.addf %13, %15 : vector<208x256xf32>
    %cst_11 = arith.constant 0.000000e+00 : f32
    %17 = vector.broadcast %cst_11 : f32 to vector<208x256xf32>
    %18 = arith.maximumf %16, %17 : vector<208x256xf32>
    %19 = arith.truncf %18 : vector<208x256xf32> to vector<208x256xbf16>
    %c0_12 = arith.constant 0 : index
    %c0_13 = arith.constant 0 : index
    %20 = vector.load %arg6[%c0_12, %c0_13] : memref<256x128xbf16, #tpu.memory_space<vmem>>, vector<256x128xbf16>
    %cst_14 = arith.constant dense<0.000000e+00> : vector<208x128xf32>
    %21 = tpu.matmul %19, %20, %cst_14 {dimension_numbers = #tpu.dot_dimension_numbers<[1], [0], [0], [1], [0, 0, 1, 1], [], []>} : vector<208x256xbf16>, vector<256x128xbf16>, vector<208x128xf32> -> vector<208x128xf32>
    %c0_15 = arith.constant 0 : index
    %c0_16 = arith.constant 0 : index
    %22 = vector.load %arg7[%c0_15, %c0_16] : memref<1x128xf32, #tpu.memory_space<vmem>>, vector<1x128xf32>
    %23 = vector.broadcast %22 : vector<1x128xf32> to vector<208x128xf32>
    %24 = arith.addf %21, %23 : vector<208x128xf32>
    %cst_17 = arith.constant 0.000000e+00 : f32
    %25 = vector.broadcast %cst_17 : f32 to vector<208x128xf32>
    %26 = arith.maximumf %24, %25 : vector<208x128xf32>
    %27 = arith.truncf %26 : vector<208x128xf32> to vector<208x128xbf16>
    %c0_18 = arith.constant 0 : index
    %c0_19 = arith.constant 0 : index
    %28 = vector.load %arg13[%c0_18, %c0_19] : memref<208x256xbf16, #tpu.memory_space<vmem>>, vector<208x128xbf16>
    tpu.vector_store %arg13[%c0_18, %c0_19], %27 {strides = array<i32>} : memref<208x256xbf16, #tpu.memory_space<vmem>>, vector<208x128xbf16>,
    %c0_20 = arith.constant 0 : index
    %c0_21 = arith.constant 0 : index
    %29 = vector.load %arg8[%c0_20, %c0_21] : memref<256x128xbf16, #tpu.memory_space<vmem>>, vector<256x128xbf16>
    %cst_22 = arith.constant dense<0.000000e+00> : vector<208x128xf32>
    %30 = tpu.matmul %11, %29, %cst_22 {dimension_numbers = #tpu.dot_dimension_numbers<[1], [0], [0], [1], [0, 0, 1, 1], [], []>} : vector<208x256xbf16>, vector<256x128xbf16>, vector<208x128xf32> -> vector<208x128xf32>
    %c0_23 = arith.constant 0 : index
    %c0_24 = arith.constant 0 : index
    %31 = vector.load %arg9[%c0_23, %c0_24] : memref<1x128xf32, #tpu.memory_space<vmem>>, vector<1x128xf32>
    %32 = vector.broadcast %31 : vector<1x128xf32> to vector<208x128xf32>
    %33 = arith.addf %30, %32 : vector<208x128xf32>
    %cst_25 = arith.constant 0.000000e+00 : f32
    %34 = vector.broadcast %cst_25 : f32 to vector<208x128xf32>
    %35 = arith.maximumf %33, %34 : vector<208x128xf32>
    %36 = arith.truncf %35 : vector<208x128xf32> to vector<208x128xbf16>
    %c0_26 = arith.constant 0 : index
    %c128 = arith.constant 128 : index
    %37 = vector.load %arg13[%c0_26, %c128] : memref<208x256xbf16, #tpu.memory_space<vmem>>, vector<208x128xbf16>
    tpu.vector_store %arg13[%c0_26, %c128], %36 {strides = array<i32>} : memref<208x256xbf16, #tpu.memory_space<vmem>>, vector<208x128xbf16>,
    %c0_27 = arith.constant 0 : index
    %c0_28 = arith.constant 0 : index
    %38 = vector.load %arg13[%c0_27, %c0_28] : memref<208x256xbf16, #tpu.memory_space<vmem>>, vector<208x256xbf16>
    %c0_29 = arith.constant 0 : index
    %c0_30 = arith.constant 0 : index
    %39 = vector.load %arg10[%c0_29, %c0_30] : memref<256x128xbf16, #tpu.memory_space<vmem>>, vector<256x128xbf16>
    %cst_31 = arith.constant dense<0.000000e+00> : vector<208x128xf32>
    %40 = tpu.matmul %38, %39, %cst_31 {dimension_numbers = #tpu.dot_dimension_numbers<[1], [0], [0], [1], [0, 0, 1, 1], [], []>} : vector<208x256xbf16>, vector<256x128xbf16>, vector<208x128xf32> -> vector<208x128xf32>
    %c0_32 = arith.constant 0 : index
    %c0_33 = arith.constant 0 : index
    %41 = vector.load %arg11[%c0_32, %c0_33] : memref<1x128xf32, #tpu.memory_space<vmem>>, vector<1x128xf32>
    %42 = vector.broadcast %41 : vector<1x128xf32> to vector<208x128xf32>
    %43 = arith.addf %40, %42 : vector<208x128xf32>
    %44 = arith.truncf %43 : vector<208x128xf32> to vector<208x128xbf16>
    %c0_34 = arith.constant 0 : index
    %c0_35 = arith.constant 0 : index
    %45 = vector.load %arg12[%c0_34, %c0_35] : memref<208x128xbf16, #tpu.memory_space<vmem>>, vector<208x128xbf16>
    tpu.vector_store %arg12[%c0_34, %c0_35], %44 {strides = array<i32>} : memref<208x128xbf16, #tpu.memory_space<vmem>>, vector<208x128xbf16>,
    return
  }
  func.func @transform_0(%arg0: i32) -> (i32, i32) {
    %c0_i32 = arith.constant 0 : i32
    %c0_i32_0 = arith.constant 0 : i32
    return %arg0, %c0_i32 : i32, i32
  }
  func.func @transform_1(%arg0: i32) -> (i32, i32) {
    %c0_i32 = arith.constant 0 : i32
    %c0_i32_0 = arith.constant 0 : i32
    %c0_i32_1 = arith.constant 0 : i32
    return %c0_i32, %c0_i32_0 : i32, i32
  }
  func.func @transform_2(%arg0: i32) -> (i32, i32) {
    %c0_i32 = arith.constant 0 : i32
    %c0_i32_0 = arith.constant 0 : i32
    %c0_i32_1 = arith.constant 0 : i32
    return %c0_i32, %c0_i32_0 : i32, i32
  }
  func.func @transform_3(%arg0: i32) -> (i32, i32) {
    %c0_i32 = arith.constant 0 : i32
    %c0_i32_0 = arith.constant 0 : i32
    %c0_i32_1 = arith.constant 0 : i32
    return %c0_i32, %c0_i32_0 : i32, i32
  }
  func.func @transform_4(%arg0: i32) -> (i32, i32) {
    %c0_i32 = arith.constant 0 : i32
    %c0_i32_0 = arith.constant 0 : i32
    %c0_i32_1 = arith.constant 0 : i32
    return %c0_i32, %c0_i32_0 : i32, i32
  }
  func.func @transform_5(%arg0: i32) -> (i32, i32) {
    %c0_i32 = arith.constant 0 : i32
    %c0_i32_0 = arith.constant 0 : i32
    %c0_i32_1 = arith.constant 0 : i32
    return %c0_i32, %c0_i32_0 : i32, i32
  }
  func.func @transform_6(%arg0: i32) -> (i32, i32) {
    %c0_i32 = arith.constant 0 : i32
    %c0_i32_0 = arith.constant 0 : i32
    %c0_i32_1 = arith.constant 0 : i32
    return %c0_i32, %c0_i32_0 : i32, i32
  }
  func.func @transform_7(%arg0: i32) -> (i32, i32) {
    %c0_i32 = arith.constant 0 : i32
    %c0_i32_0 = arith.constant 0 : i32
    %c0_i32_1 = arith.constant 0 : i32
    return %c0_i32, %c0_i32_0 : i32, i32
  }
  func.func @transform_8(%arg0: i32) -> (i32, i32) {
    %c0_i32 = arith.constant 0 : i32
    %c0_i32_0 = arith.constant 0 : i32
    %c0_i32_1 = arith.constant 0 : i32
    return %c0_i32, %c0_i32_0 : i32, i32
  }
  func.func @transform_9(%arg0: i32) -> (i32, i32) {
    %c0_i32 = arith.constant 0 : i32
    %c0_i32_0 = arith.constant 0 : i32
    %c0_i32_1 = arith.constant 0 : i32
    return %c0_i32, %c0_i32_0 : i32, i32
  }
  func.func @transform_10(%arg0: i32) -> (i32, i32) {
    %c0_i32 = arith.constant 0 : i32
    %c0_i32_0 = arith.constant 0 : i32
    %c0_i32_1 = arith.constant 0 : i32
    return %c0_i32, %c0_i32_0 : i32, i32
  }
  func.func @transform_11(%arg0: i32) -> (i32, i32) {
    %c0_i32 = arith.constant 0 : i32
    %c0_i32_0 = arith.constant 0 : i32
    return %arg0, %c0_i32 : i32, i32
  }
}

</mosaic_0001>

<llo_original>
// kernel: tpu_custom_call.1
$region0: #{tpu_custom_call.1}
  #allocation0 [shape = 'u32[]', space=smem, size = 0x4, offset = 0x4, fixed_abs, tag = 'smem constant byte address 0x4 - core index']
  #allocation1 [shape = 'u32[144,128]{1,0:T(1,128)}', space=vmem, size = 0x12000, scoped, tag = 'internal scratch']
  #allocation2 [shape = 'bf16[208,256]{1,0:T(16,128)(2,1)}', space=vmem, size = 0x1a000, scoped, tag = 'scratch operand']
  %s0 = inlined_call_operand.vmem [shape: f32[208,64], index: 0, kind: input, shape index: {}]
  %s1 = inlined_call_operand.vmem [shape: bf16[64,768], index: 1, kind: input, shape index: {}]
  %s2 = inlined_call_operand.vmem [shape: f32[1,768], index: 2, kind: input, shape index: {}]
  %s3 = inlined_call_operand.hbm [shape: bf16[512,256], index: 3, kind: input, shape index: {}]
  %s4 = inlined_call_operand.vmem [shape: f32[1,256], index: 4, kind: input, shape index: {}]
  %s5 = inlined_call_operand.vmem [shape: bf16[256,128], index: 5, kind: input, shape index: {}]
  %s6 = inlined_call_operand.vmem [shape: f32[1,128], index: 6, kind: input, shape index: {}]
  %s7 = inlined_call_operand.hbm [shape: bf16[256,128], index: 7, kind: input, shape index: {}]
  %s8 = inlined_call_operand.vmem [shape: f32[1,128], index: 8, kind: input, shape index: {}]
  %s9 = inlined_call_operand.hbm [shape: bf16[256,128], index: 9, kind: input, shape index: {}]
  %s10 = inlined_call_operand.vmem [shape: f32[1,128], index: 10, kind: input, shape index: {}]
  %s11 = inlined_call_operand.hbm [shape: bf16[208,128], index: 11, kind: output, shape index: {}]
  %s12 = sld [smem:[#allocation0]]
  $region66: #{tpu_custom_call.1} parent=0
    _
  %s14 = ssub.s32 1, %s12
  %s15 = scalar_select 0, %s14, %s12
  $region1: #{tpu_custom_call.1} parent=0
    #allocation3 [shape = 'u8[262144]{0}', space=vmem, size = 0x40000, scoped, tag = 'input window, operand 3, single buffered']
    #allocation4 [shape = 's32[1]{0}', space=sflag, size = 0x4, scoped, tag = 'scoped memory for tpu_custom_call.1']
    #allocation5 [shape = 's32[1]{0}', space=sflag, size = 0x4, scoped, tag = 'scoped memory for tpu_custom_call.1']
    #allocation6 [shape = 'u8[65536]{0}', space=vmem, size = 0x10000, scoped, tag = 'input window, operand 7, single buffered']
    #allocation7 [shape = 's32[1]{0}', space=sflag, size = 0x4, scoped, tag = 'scoped memory for tpu_custom_call.1']
    #allocation8 [shape = 'u8[65536]{0}', space=vmem, size = 0x10000, scoped, tag = 'input window, operand 9, single buffered']
    #allocation9 [shape = 'u8[53248]{0}', space=vmem, size = 0xd000, scoped, tag = 'output window, operand 0, single buffered']
    %16 = vsyncpa [#allocation4], 0
    %17 = vsyncpa [#allocation7], 0
    %18 = vsyncpa [#allocation5], 0
    // Predicated region
    $region2: #{tpu_custom_call.1} parent=1 // pred_check
      _
    $region3: #{tpu_custom_call.1} parent=1 // pred_check_branch
      %20 = sbr.rel (0) target = $region5
    $region4: #{tpu_custom_call.1} parent=1 // pred_region
      _
    $region5: #{tpu_custom_call.1} parent=1 // pred_fallthru
      _
    // Predicated region
    $region6: #{tpu_custom_call.1} parent=1 // pred_check
      _
    $region7: #{tpu_custom_call.1} parent=1 // pred_check_branch
      %22 = sbr.rel (0) target = $region9
    $region8: #{tpu_custom_call.1} parent=1 // pred_region
      _
    $region9: #{tpu_custom_call.1} parent=1 // pred_fallthru
      _
    // Predicated region
    $region10: #{tpu_custom_call.1} parent=1 // pred_check
      _
    $region11: #{tpu_custom_call.1} parent=1 // pred_check_branch
      %24 = sbr.rel (0) target = $region13
    $region12: #{tpu_custom_call.1} parent=1 // pred_region
      _
    $region13: #{tpu_custom_call.1} parent=1 // pred_fallthru
      _
    // Predicated region
    $region14: #{tpu_custom_call.1} parent=1 // pred_check
      _
    $region15: #{tpu_custom_call.1} parent=1 // pred_check_branch
      %26 = sbr.rel (0) target = $region17
    $region16: #{tpu_custom_call.1} parent=1 // pred_region
      %s28 = ssub.s32 8192, 8192
      %29 = vsyncadd [#allocation4], %s28
      %s30 = sshll.u32 [#allocation3], 4
      %s31 = int_to_ptr.vmem [resolvable:$true] %s30
      %36 = dma.hbm_to_vmem [thread:$0]  %s3, 8192, %s31, [#allocation4], 128, 128, 8
    $region17: #{tpu_custom_call.1} parent=1 // pred_fallthru
      _
    // Predicated region
    $region18: #{tpu_custom_call.1} parent=1 // pred_check
      _
    $region19: #{tpu_custom_call.1} parent=1 // pred_check_branch
      %38 = sbr.rel (0) target = $region21
    $region20: #{tpu_custom_call.1} parent=1 // pred_region
      _
    $region21: #{tpu_custom_call.1} parent=1 // pred_fallthru
      _
    // Predicated region
    $region22: #{tpu_custom_call.1} parent=1 // pred_check
      _
    $region23: #{tpu_custom_call.1} parent=1 // pred_check_branch
      %40 = sbr.rel (0) target = $region25
    $region24: #{tpu_custom_call.1} parent=1 // pred_region
      _
    $region25: #{tpu_custom_call.1} parent=1 // pred_fallthru
      _
    // Predicated region
    $region26: #{tpu_custom_call.1} parent=1 // pred_check
      _
    $region27: #{tpu_custom_call.1} parent=1 // pred_check_branch
      %42 = sbr.rel (0) target = $region29
    $region28: #{tpu_custom_call.1} parent=1 // pred_region
      _
    $region29: #{tpu_custom_call.1} parent=1 // pred_fallthru
      _
    // Predicated region
    $region30: #{tpu_custom_call.1} parent=1 // pred_check
      _
    $region31: #{tpu_custom_call.1} parent=1 // pred_check_branch
      %44 = sbr.rel (0) target = $region33
    $region32: #{tpu_custom_call.1} parent=1 // pred_region
      %s46 = ssub.s32 2048, 2048
      %47 = vsyncadd [#allocation7], %s46
      %s48 = sshll.u32 [#allocation6], 4
      %s49 = int_to_ptr.vmem [resolvable:$true] %s48
      %54 = dma.hbm_to_vmem [thread:$0]  %s7, 2048, %s49, [#allocation7], 64, 64, 4
    $region33: #{tpu_custom_call.1} parent=1 // pred_fallthru
      _
    // Predicated region
    $region34: #{tpu_custom_call.1} parent=1 // pred_check
      _
    $region35: #{tpu_custom_call.1} parent=1 // pred_check_branch
      %56 = sbr.rel (0) target = $region37
    $region36: #{tpu_custom_call.1} parent=1 // pred_region
      _
    $region37: #{tpu_custom_call.1} parent=1 // pred_fallthru
      _
    // Predicated region
    $region38: #{tpu_custom_call.1} parent=1 // pred_check
      _
    $region39: #{tpu_custom_call.1} parent=1 // pred_check_branch
      %58 = sbr.rel (0) target = $region41
    $region40: #{tpu_custom_call.1} parent=1 // pred_region
      %s60 = ssub.s32 2048, 2048
      %61 = vsyncadd [#allocation7], %s60
      %s62 = sshll.u32 [#allocation8], 4
      %s63 = int_to_ptr.vmem [resolvable:$true] %s62
      %68 = dma.hbm_to_vmem [thread:$0]  %s9, 2048, %s63, [#allocation7], 64, 64, 4
    $region41: #{tpu_custom_call.1} parent=1 // pred_fallthru
      _
    // Predicated region
    $region42: #{tpu_custom_call.1} parent=1 // pred_check
      _
    $region43: #{tpu_custom_call.1} parent=1 // pred_check_branch
      %70 = sbr.rel (0) target = $region45
    $region44: #{tpu_custom_call.1} parent=1 // pred_region
      _
    $region45: #{tpu_custom_call.1} parent=1 // pred_fallthru
      _
    // Predicated region
    $region46: #{tpu_custom_call.1} parent=1 // pred_check
      _
    $region47: #{tpu_custom_call.1} parent=1 // pred_check_branch
      %72 = sbr.rel (0) target = $region49
    $region48: #{tpu_custom_call.1} parent=1 // pred_region
      %73 = dma.done [#allocation4], 8192
    $region49: #{tpu_custom_call.1} parent=1 // pred_fallthru
      _
    // Predicated region
    $region50: #{tpu_custom_call.1} parent=1 // pred_check
      _
    $region51: #{tpu_custom_call.1} parent=1 // pred_check_branch
      %75 = sbr.rel (0) target = $region53
    $region52: #{tpu_custom_call.1} parent=1 // pred_region
      %76 = dma.done [#allocation7], 2048
    $region53: #{tpu_custom_call.1} parent=1 // pred_fallthru
      _
    // Predicated region
    $region54: #{tpu_custom_call.1} parent=1 // pred_check
      _
    $region55: #{tpu_custom_call.1} parent=1 // pred_check_branch
      %78 = sbr.rel (0) target = $region57
    $region56: #{tpu_custom_call.1} parent=1 // pred_region
      %79 = dma.done [#allocation7], 2048
    $region57: #{tpu_custom_call.1} parent=1 // pred_fallthru
      _
    %v81 = vld [vmem:[%s0] sm:$0xff]
    %v82 = vld [vmem:[%s0 + $0x8] sm:$0xff]
    %v83 = vld [vmem:[%s0 + $0x10] sm:$0xff]
    %v84 = vld [vmem:[%s0 + $0x18] sm:$0xff]
    %v85 = vld [vmem:[%s0 + $0x20] sm:$0xff]
    %v86 = vld [vmem:[%s0 + $0x28] sm:$0xff]
    %v87 = vld [vmem:[%s0 + $0x30] sm:$0xff]
    %v88 = vld [vmem:[%s0 + $0x38] sm:$0xff]
    %v89 = vld [vmem:[%s0 + $0x40] sm:$0xff]
    %v90 = vld [vmem:[%s0 + $0x48] sm:$0xff]
    %v91 = vld [vmem:[%s0 + $0x50] sm:$0xff]
    %v92 = vld [vmem:[%s0 + $0x58] sm:$0xff]
    %v93 = vld [vmem:[%s0 + $0x60] sm:$0xff]
    %v94 = vld [vmem:[%s0 + $0x68] sm:$0xff]
    %v95 = vld [vmem:[%s0 + $0x70] sm:$0xff]
    %v96 = vld [vmem:[%s0 + $0x78] sm:$0xff]
    %v97 = vld [vmem:[%s0 + $0x80] sm:$0xff]
    %v98 = vld [vmem:[%s0 + $0x88] sm:$0xff]
    %v99 = vld [vmem:[%s0 + $0x90] sm:$0xff]
    %v100 = vld [vmem:[%s0 + $0x98] sm:$0xff]
    %v101 = vld [vmem:[%s0 + $0xa0] sm:$0xff]
    %v102 = vld [vmem:[%s0 + $0xa8] sm:$0xff]
    %v103 = vld [vmem:[%s0 + $0xb0] sm:$0xff]
    %v104 = vld [vmem:[%s0 + $0xb8] sm:$0xff]
    %v105 = vld [vmem:[%s0 + $0xc0] sm:$0xff]
    %v106 = vld [vmem:[%s0 + $0xc8] sm:$0xff]
    %v107 = vpack.c.bf16 %v82, %v81
    %v108 = vpack.c.bf16 %v84, %v83
    %v109 = vpack.c.bf16 %v86, %v85
    %v110 = vpack.c.bf16 %v88, %v87
    %v111 = vpack.c.bf16 %v90, %v89
    %v112 = vpack.c.bf16 %v92, %v91
    %v113 = vpack.c.bf16 %v94, %v93
    %v114 = vpack.c.bf16 %v96, %v95
    %v115 = vpack.c.bf16 %v98, %v97
    %v116 = vpack.c.bf16 %v100, %v99
    %v117 = vpack.c.bf16 %v102, %v101
    %v118 = vpack.c.bf16 %v104, %v103
    %v119 = vpack.c.bf16 %v106, %v105
    %v120 = vld [vmem:[%s1] sm:$0xff]
    %v121 = vld [vmem:[%s1 + $0x8] sm:$0xff]
    %v122 = vld [vmem:[%s1 + $0x10] sm:$0xff]
    %v123 = vld [vmem:[%s1 + $0x18] sm:$0xff]
    %v124 = vld [vmem:[%s1 + $0x20] sm:$0xff]
    %v125 = vld [vmem:[%s1 + $0x28] sm:$0xff]
    %v126 = vld [vmem:[%s1 + $0x30] sm:$0xff]
    %v127 = vld [vmem:[%s1 + $0x38] sm:$0xff]
    %v128 = vld [vmem:[%s1 + $0x40] sm:$0xff]
    %v129 = vld [vmem:[%s1 + $0x48] sm:$0xff]
    %v130 = vld [vmem:[%s1 + $0x50] sm:$0xff]
    %v131 = vld [vmem:[%s1 + $0x58] sm:$0xff]
    %v132 = vld [vmem:[%s1 + $0x60] sm:$0xff]
    %v133 = vld [vmem:[%s1 + $0x68] sm:$0xff]
    %v134 = vld [vmem:[%s1 + $0x70] sm:$0xff]
    %v135 = vld [vmem:[%s1 + $0x78] sm:$0xff]
    %v136 = vld [vmem:[%s1 + $0x80] sm:$0xff]
    %v137 = vld [vmem:[%s1 + $0x88] sm:$0xff]
    %v138 = vld [vmem:[%s1 + $0x90] sm:$0xff]
    %v139 = vld [vmem:[%s1 + $0x98] sm:$0xff]
    %v140 = vld [vmem:[%s1 + $0xa0] sm:$0xff]
    %v141 = vld [vmem:[%s1 + $0xa8] sm:$0xff]
    %v142 = vld [vmem:[%s1 + $0xb0] sm:$0xff]
    %v143 = vld [vmem:[%s1 + $0xb8] sm:$0xff]
    %v144 = vld [vmem:[%s2] sm:$0x3f]
    %v146 = vlaneseq
    %v147 = vshrl.u32 %v146, 7
    %v148 = vsub.s32 0, %v147
    %v149 = vrot.slane %v144, %v148
    %v150 = vlaneseq
    %v151 = vshrl.u32 %v150, 7
    %v152 = vsub.s32 1, %v151
    %v153 = vrot.slane %v144, %v152
    %v154 = vlaneseq
    %v155 = vshrl.u32 %v154, 7
    %v156 = vsub.s32 2, %v155
    %v157 = vrot.slane %v144, %v156
    %v158 = vlaneseq
    %v159 = vshrl.u32 %v158, 7
    %v160 = vsub.s32 3, %v159
    %v161 = vrot.slane %v144, %v160
    %v162 = vlaneseq
    %v163 = vshrl.u32 %v162, 7
    %v164 = vsub.s32 4, %v163
    %v165 = vrot.slane %v144, %v164
    %v166 = vlaneseq
    %v167 = vshrl.u32 %v166, 7
    %v168 = vsub.s32 5, %v167
    %v169 = vrot.slane %v144, %v168
    %v200 = vunpack.c.l.b16 %v120
    %v201 = vunpack.c.h.b16 %v120
    %v202 = vunpack.c.l.b16 %v121
    %v203 = vunpack.c.h.b16 %v121
    %v204 = vunpack.c.l.b16 %v122
    %v205 = vunpack.c.h.b16 %v122
    %v206 = vunpack.c.l.b16 %v123
    %v207 = vunpack.c.h.b16 %v123
    %v208 = vunpack.c.l.b16 %v124
    %v209 = vunpack.c.h.b16 %v124
    %v210 = vunpack.c.l.b16 %v125
    %v211 = vunpack.c.h.b16 %v125
    %v212 = vunpack.c.l.b16 %v126
    %v213 = vunpack.c.h.b16 %v126
    %v214 = vunpack.c.l.b16 %v127
    %v215 = vunpack.c.h.b16 %v127
    %v216 = vunpack.c.l.b16 %v128
    %v217 = vunpack.c.h.b16 %v128
    %v218 = vunpack.c.l.b16 %v129
    %v219 = vunpack.c.h.b16 %v129
    %v220 = vunpack.c.l.b16 %v130
    %v221 = vunpack.c.h.b16 %v130
    %v222 = vunpack.c.l.b16 %v131
    %v223 = vunpack.c.h.b16 %v131
    %v224 = vunpack.c.l.b16 %v132
    %v225 = vunpack.c.h.b16 %v132
    %v226 = vunpack.c.l.b16 %v133
    %v227 = vunpack.c.h.b16 %v133
    %v228 = vunpack.c.l.b16 %v134
    %v229 = vunpack.c.h.b16 %v134
    %v230 = vunpack.c.l.b16 %v135
    %v231 = vunpack.c.h.b16 %v135
    %v232 = vunpack.c.l.b16 %v136
    %v233 = vunpack.c.h.b16 %v136
    %v234 = vunpack.c.l.b16 %v137
    %v235 = vunpack.c.h.b16 %v137
    %v236 = vunpack.c.l.b16 %v138
    %v237 = vunpack.c.h.b16 %v138
    %v238 = vunpack.c.l.b16 %v139
    %v239 = vunpack.c.h.b16 %v139
    %v240 = vunpack.c.l.b16 %v140
    %v241 = vunpack.c.h.b16 %v140
    %v242 = vunpack.c.l.b16 %v141
    %v243 = vunpack.c.h.b16 %v141
    %v244 = vunpack.c.l.b16 %v142
    %v245 = vunpack.c.h.b16 %v142
    %v246 = vunpack.c.l.b16 %v143
    %v247 = vunpack.c.h.b16 %v143
    %v248 = vpack.c.b16 %v206, %v200
    %v249 = vpack.c.b16 %v207, %v201
    %v250 = vpack.c.b16 %v208, %v202
    %v251 = vpack.c.b16 %v209, %v203
    %v252 = vpack.c.b16 %v210, %v204
    %v253 = vpack.c.b16 %v211, %v205
    %v254 = vpack.c.b16 %v218, %v212
    %v255 = vpack.c.b16 %v219, %v213
    %v256 = vpack.c.b16 %v220, %v214
    %v257 = vpack.c.b16 %v221, %v215
    %v258 = vpack.c.b16 %v222, %v216
    %v259 = vpack.c.b16 %v223, %v217
    %v260 = vpack.c.b16 %v230, %v224
    %v261 = vpack.c.b16 %v231, %v225
    %v262 = vpack.c.b16 %v232, %v226
    %v263 = vpack.c.b16 %v233, %v227
    %v264 = vpack.c.b16 %v234, %v228
    %v265 = vpack.c.b16 %v235, %v229
    %v266 = vpack.c.b16 %v242, %v236
    %v267 = vpack.c.b16 %v243, %v237
    %v268 = vpack.c.b16 %v244, %v238
    %v269 = vpack.c.b16 %v245, %v239
    %v270 = vpack.c.b16 %v246, %v240
    %v271 = vpack.c.b16 %v247, %v241
    %vm296 = vcmask 523264
    %v298 = vsel %vm296, %v107, 0
    %v301 = vsel %vm296, %v108, 0
    %v304 = vsel %vm296, %v109, 0
    %v307 = vsel %vm296, %v110, 0
    %v310 = vsel %vm296, %v111, 0
    %v313 = vsel %vm296, %v112, 0
    %v316 = vsel %vm296, %v113, 0
    %v319 = vsel %vm296, %v114, 0
    %v322 = vsel %vm296, %v115, 0
    %v325 = vsel %vm296, %v116, 0
    %v328 = vsel %vm296, %v117, 0
    %v331 = vsel %vm296, %v118, 0
    %v334 = vsel %vm296, %v119, 0
    %336 = vmatprep.subr.bf16.mxu0 %v249
    %337 = vmatpush1.bf16.msra.mxu0 %v248
    %338 = vmatprep.subr.bf16.mxu0 %v255
    %339 = vmatpush1.bf16.msra.mxu0 %v254
    %340 = vmatprep.subr.bf16.mxu0 %v261
    %341 = vmatpush1.bf16.msra.mxu0 %v260
    %342 = vmatprep.subr.bf16.mxu0 %v267
    %343 = vmatpush1.bf16.msra.mxu0 %v266
    %344 = vmatprep.subr.bf16.mxu0 0
    %345 = vmatpush1.bf16.msra.mxu0 0
    %346 = vmatprep.subr.bf16.mxu0 0
    %347 = vmatpush1.bf16.msra.mxu0 0
    %348 = vmatprep.subr.bf16.mxu0 0
    %349 = vmatpush1.bf16.msra.mxu0 0
    %350 = vmatprep.subr.bf16.mxu0 0
    %351 = vmatpush1.bf16.msra.mxu0 0
    %352 = vmatprep.subr.bf16.mxu0 0
    %353 = vmatpush1.bf16.msra.mxu0 0
    %354 = vmatprep.subr.bf16.mxu0 0
    %355 = vmatpush1.bf16.msra.mxu0 0
    %356 = vmatprep.subr.bf16.mxu0 0
    %357 = vmatpush1.bf16.msra.mxu0 0
    %358 = vmatprep.subr.bf16.mxu0 0
    %359 = vmatpush1.bf16.msra.mxu0 0
    %360 = vmatprep.subr.bf16.mxu0 0
    %361 = vmatpush1.bf16.msra.mxu0 0
    %362 = vmatprep.subr.bf16.mxu0 0
    %363 = vmatpush1.bf16.msra.mxu0 0
    %364 = vmatprep.subr.bf16.mxu0 0
    %365 = vmatpush1.bf16.msra.mxu0 0
    %366 = vmatprep.subr.bf16.mxu0 0
    %367 = vmatpush1.bf16.msra.mxu0 0
    %368 = vmatprep.mubr.bf16.mxu0 0
    %369 = vmatmul.mubr.bf16.gmra.mrb[0].mxu0 %v298
    %v370 = vpop.f32.mrb[0].mxu0
    %v371 = vadd.f32 %v149, %v370
    %v372 = vpop.f32.mrb[0].mxu0
    %v373 = vadd.f32 %v153, %v372
    %v374 = vpop.f32.mrb[0].mxu0
    %v375 = vadd.f32 %v149, %v374
    %v376 = vpop.f32.mrb[0].mxu0
    %v377 = vadd.f32 %v153, %v376
    %378 = vmatprep.mubr.bf16.mxu0 0
    %379 = vmatmul.mubr.bf16.gmra.mrb[0].mxu0 %v301
    %v380 = vpop.f32.mrb[0].mxu0
    %v381 = vadd.f32 %v149, %v380
    %v382 = vpop.f32.mrb[0].mxu0
    %v383 = vadd.f32 %v153, %v382
    %v384 = vpop.f32.mrb[0].mxu0
    %v385 = vadd.f32 %v149, %v384
    %v386 = vpop.f32.mrb[0].mxu0
    %v387 = vadd.f32 %v153, %v386
    %388 = vmatprep.mubr.bf16.mxu0 0
    %389 = vmatmul.mubr.bf16.gmra.mrb[0].mxu0 %v304
    %v390 = vpop.f32.mrb[0].mxu0
    %v391 = vadd.f32 %v149, %v390
    %v392 = vpop.f32.mrb[0].mxu0
    %v393 = vadd.f32 %v153, %v392
    %v394 = vpop.f32.mrb[0].mxu0
    %v395 = vadd.f32 %v149, %v394
    %v396 = vpop.f32.mrb[0].mxu0
    %v397 = vadd.f32 %v153, %v396
    %398 = vmatprep.mubr.bf16.mxu0 0
    %399 = vmatmul.mubr.bf16.gmra.mrb[0].mxu0 %v307
    %v400 = vpop.f32.mrb[0].mxu0
    %v401 = vadd.f32 %v149, %v400
    %v402 = vpop.f32.mrb[0].mxu0
    %v403 = vadd.f32 %v153, %v402
    %v404 = vpop.f32.mrb[0].mxu0
    %v405 = vadd.f32 %v149, %v404
    %v406 = vpop.f32.mrb[0].mxu0
    %v407 = vadd.f32 %v153, %v406
    %408 = vmatprep.mubr.bf16.mxu0 0
    %409 = vmatmul.mubr.bf16.gmra.mrb[0].mxu0 %v310
    %v410 = vpop.f32.mrb[0].mxu0
    %v411 = vadd.f32 %v149, %v410
    %v412 = vpop.f32.mrb[0].mxu0
    %v413 = vadd.f32 %v153, %v412
    %v414 = vpop.f32.mrb[0].mxu0
    %v415 = vadd.f32 %v149, %v414
    %v416 = vpop.f32.mrb[0].mxu0
    %v417 = vadd.f32 %v153, %v416
    %418 = vmatprep.mubr.bf16.mxu0 0
    %419 = vmatmul.mubr.bf16.gmra.mrb[0].mxu0 %v313
    %v420 = vpop.f32.mrb[0].mxu0
    %v421 = vadd.f32 %v149, %v420
    %v422 = vpop.f32.mrb[0].mxu0
    %v423 = vadd.f32 %v153, %v422
    %v424 = vpop.f32.mrb[0].mxu0
    %v425 = vadd.f32 %v149, %v424
    %v426 = vpop.f32.mrb[0].mxu0
    %v427 = vadd.f32 %v153, %v426
    %428 = vmatprep.mubr.bf16.mxu0 0
    %429 = vmatmul.mubr.bf16.gmra.mrb[0].mxu0 %v316
    %v430 = vpop.f32.mrb[0].mxu0
    %v431 = vadd.f32 %v149, %v430
    %v432 = vpop.f32.mrb[0].mxu0
    %v433 = vadd.f32 %v153, %v432
    %v434 = vpop.f32.mrb[0].mxu0
    %v435 = vadd.f32 %v149, %v434
    %v436 = vpop.f32.mrb[0].mxu0
    %v437 = vadd.f32 %v153, %v436
    %438 = vmatprep.mubr.bf16.mxu0 0
    %439 = vmatmul.mubr.bf16.gmra.mrb[0].mxu0 %v319
    %v440 = vpop.f32.mrb[0].mxu0
    %v441 = vadd.f32 %v149, %v440
    %v442 = vpop.f32.mrb[0].mxu0
    %v443 = vadd.f32 %v153, %v442
    %v444 = vpop.f32.mrb[0].mxu0
    %v445 = vadd.f32 %v149, %v444
    %v446 = vpop.f32.mrb[0].mxu0
    %v447 = vadd.f32 %v153, %v446
    %448 = vmatprep.mubr.bf16.mxu0 0
    %449 = vmatmul.mubr.bf16.gmra.mrb[0].mxu0 %v322
    %v450 = vpop.f32.mrb[0].mxu0
    %v451 = vadd.f32 %v149, %v450
    %v452 = vpop.f32.mrb[0].mxu0
    %v453 = vadd.f32 %v153, %v452
    %v454 = vpop.f32.mrb[0].mxu0
    %v455 = vadd.f32 %v149, %v454
    %v456 = vpop.f32.mrb[0].mxu0
    %v457 = vadd.f32 %v153, %v456
    %458 = vmatprep.mubr.bf16.mxu0 0
    %459 = vmatmul.mubr.bf16.gmra.mrb[0].mxu0 %v325
    %v460 = vpop.f32.mrb[0].mxu0
    %v461 = vadd.f32 %v149, %v460
    %v462 = vpop.f32.mrb[0].mxu0
    %v463 = vadd.f32 %v153, %v462
    %v464 = vpop.f32.mrb[0].mxu0
    %v465 = vadd.f32 %v149, %v464
    %v466 = vpop.f32.mrb[0].mxu0
    %v467 = vadd.f32 %v153, %v466
    %468 = vmatprep.mubr.bf16.mxu0 0
    %469 = vmatmul.mubr.bf16.gmra.mrb[0].mxu0 %v328
    %v470 = vpop.f32.mrb[0].mxu0
    %v471 = vadd.f32 %v149, %v470
    %v472 = vpop.f32.mrb[0].mxu0
    %v473 = vadd.f32 %v153, %v472
    %v474 = vpop.f32.mrb[0].mxu0
    %v475 = vadd.f32 %v149, %v474
    %v476 = vpop.f32.mrb[0].mxu0
    %v477 = vadd.f32 %v153, %v476
    %478 = vmatprep.mubr.bf16.mxu0 0
    %479 = vmatmul.mubr.bf16.gmra.mrb[0].mxu0 %v331
    %v480 = vpop.f32.mrb[0].mxu0
    %v481 = vadd.f32 %v149, %v480
    %v482 = vpop.f32.mrb[0].mxu0
    %v483 = vadd.f32 %v153, %v482
    %v484 = vpop.f32.mrb[0].mxu0
    %v485 = vadd.f32 %v149, %v484
    %v486 = vpop.f32.mrb[0].mxu0
    %v487 = vadd.f32 %v153, %v486
    %488 = vmatprep.mubr.bf16.mxu0 0
    %489 = vmatmul.mubr.bf16.gmra.mrb[0].mxu0 %v334
    %v490 = vpop.f32.mrb[0].mxu0
    %v491 = vadd.f32 %v149, %v490
    %v492 = vpop.f32.mrb[0].mxu0
    %v493 = vadd.f32 %v153, %v492
    %v494 = vpop.f32.mrb[0].mxu0
    %v495 = vadd.f32 %v149, %v494
    %v496 = vpop.f32.mrb[0].mxu0
    %v497 = vadd.f32 %v153, %v496
    %498 = vdwg.mxu0
    %499 = vmatprep.subr.bf16.mxu0 %v251
    %500 = vmatpush1.bf16.msra.mxu0 %v250
    %501 = vmatprep.subr.bf16.mxu0 %v257
    %502 = vmatpush1.bf16.msra.mxu0 %v256
    %503 = vmatprep.subr.bf16.mxu0 %v263
    %504 = vmatpush1.bf16.msra.mxu0 %v262
    %505 = vmatprep.subr.bf16.mxu0 %v269
    %506 = vmatpush1.bf16.msra.mxu0 %v268
    %507 = vmatprep.subr.bf16.mxu0 0
    %508 = vmatpush1.bf16.msra.mxu0 0
    %509 = vmatprep.subr.bf16.mxu0 0
    %510 = vmatpush1.bf16.msra.mxu0 0
    %511 = vmatprep.subr.bf16.mxu0 0
    %512 = vmatpush1.bf16.msra.mxu0 0
    %513 = vmatprep.subr.bf16.mxu0 0
    %514 = vmatpush1.bf16.msra.mxu0 0
    %515 = vmatprep.subr.bf16.mxu0 0
    %516 = vmatpush1.bf16.msra.mxu0 0
    %517 = vmatprep.subr.bf16.mxu0 0
    %518 = vmatpush1.bf16.msra.mxu0 0
    %519 = vmatprep.subr.bf16.mxu0 0
    %520 = vmatpush1.bf16.msra.mxu0 0
    %521 = vmatprep.subr.bf16.mxu0 0
    %522 = vmatpush1.bf16.msra.mxu0 0
    %523 = vmatprep.subr.bf16.mxu0 0
    %524 = vmatpush1.bf16.msra.mxu0 0
    %525 = vmatprep.subr.bf16.mxu0 0
    %526 = vmatpush1.bf16.msra.mxu0 0
    %527 = vmatprep.subr.bf16.mxu0 0
    %528 = vmatpush1.bf16.msra.mxu0 0
    %529 = vmatprep.subr.bf16.mxu0 0
    %530 = vmatpush1.bf16.msra.mxu0 0
    %531 = vmatprep.mubr.bf16.mxu0 0
    %532 = vmatmul.mubr.bf16.gmra.mrb[0].mxu0 %v298
    %v533 = vpop.f32.mrb[0].mxu0
    %v534 = vadd.f32 %v157, %v533
    %v535 = vpop.f32.mrb[0].mxu0
    %v536 = vadd.f32 %v161, %v535
    %v537 = vpop.f32.mrb[0].mxu0
    %v538 = vadd.f32 %v157, %v537
    %v539 = vpop.f32.mrb[0].mxu0
    %v540 = vadd.f32 %v161, %v539
    %541 = vmatprep.mubr.bf16.mxu0 0
    %542 = vmatmul.mubr.bf16.gmra.mrb[0].mxu0 %v301
    %v543 = vpop.f32.mrb[0].mxu0
    %v544 = vadd.f32 %v157, %v543
    %v545 = vpop.f32.mrb[0].mxu0
    %v546 = vadd.f32 %v161, %v545
    %v547 = vpop.f32.mrb[0].mxu0
    %v548 = vadd.f32 %v157, %v547
    %v549 = vpop.f32.mrb[0].mxu0
    %v550 = vadd.f32 %v161, %v549
    %551 = vmatprep.mubr.bf16.mxu0 0
    %552 = vmatmul.mubr.bf16.gmra.mrb[0].mxu0 %v304
    %v553 = vpop.f32.mrb[0].mxu0
    %v554 = vadd.f32 %v157, %v553
    %v555 = vpop.f32.mrb[0].mxu0
    %v556 = vadd.f32 %v161, %v555
    %v557 = vpop.f32.mrb[0].mxu0
    %v558 = vadd.f32 %v157, %v557
    %v559 = vpop.f32.mrb[0].mxu0
    %v560 = vadd.f32 %v161, %v559
    %561 = vmatprep.mubr.bf16.mxu0 0
    %562 = vmatmul.mubr.bf16.gmra.mrb[0].mxu0 %v307
    %v563 = vpop.f32.mrb[0].mxu0
    %v564 = vadd.f32 %v157, %v563
    %v565 = vpop.f32.mrb[0].mxu0
    %v566 = vadd.f32 %v161, %v565
    %v567 = vpop.f32.mrb[0].mxu0
    %v568 = vadd.f32 %v157, %v567
    %v569 = vpop.f32.mrb[0].mxu0
    %v570 = vadd.f32 %v161, %v569
    %571 = vmatprep.mubr.bf16.mxu0 0
    %572 = vmatmul.mubr.bf16.gmra.mrb[0].mxu0 %v310
    %v573 = vpop.f32.mrb[0].mxu0
    %v574 = vadd.f32 %v157, %v573
    %v575 = vpop.f32.mrb[0].mxu0
    %v576 = vadd.f32 %v161, %v575
    %v577 = vpop.f32.mrb[0].mxu0
    %v578 = vadd.f32 %v157, %v577
    %v579 = vpop.f32.mrb[0].mxu0
    %v580 = vadd.f32 %v161, %v579
    %581 = vmatprep.mubr.bf16.mxu0 0
    %582 = vmatmul.mubr.bf16.gmra.mrb[0].mxu0 %v313
    %v583 = vpop.f32.mrb[0].mxu0
    %v584 = vadd.f32 %v157, %v583
    %v585 = vpop.f32.mrb[0].mxu0
    %v586 = vadd.f32 %v161, %v585
    %v587 = vpop.f32.mrb[0].mxu0
    %v588 = vadd.f32 %v157, %v587
    %v589 = vpop.f32.mrb[0].mxu0
    %v590 = vadd.f32 %v161, %v589
    %591 = vmatprep.mubr.bf16.mxu0 0
    %592 = vmatmul.mubr.bf16.gmra.mrb[0].mxu0 %v316
    %v593 = vpop.f32.mrb[0].mxu0
    %v594 = vadd.f32 %v157, %v593
    %v595 = vpop.f32.mrb[0].mxu0
    %v596 = vadd.f32 %v161, %v595
    %v597 = vpop.f32.mrb[0].mxu0
    %v598 = vadd.f32 %v157, %v597
    %v599 = vpop.f32.mrb[0].mxu0
    %v600 = vadd.f32 %v161, %v599
    %601 = vmatprep.mubr.bf16.mxu0 0
    %602 = vmatmul.mubr.bf16.gmra.mrb[0].mxu0 %v319
    %v603 = vpop.f32.mrb[0].mxu0
    %v604 = vadd.f32 %v157, %v603
    %v605 = vpop.f32.mrb[0].mxu0
    %v606 = vadd.f32 %v161, %v605
    %v607 = vpop.f32.mrb[0].mxu0
    %v608 = vadd.f32 %v157, %v607
    %v609 = vpop.f32.mrb[0].mxu0
    %v610 = vadd.f32 %v161, %v609
    %611 = vmatprep.mubr.bf16.mxu0 0
    %612 = vmatmul.mubr.bf16.gmra.mrb[0].mxu0 %v322
    %v613 = vpop.f32.mrb[0].mxu0
    %v614 = vadd.f32 %v157, %v613
    %v615 = vpop.f32.mrb[0].mxu0
    %v616 = vadd.f32 %v161, %v615
    %v617 = vpop.f32.mrb[0].mxu0
    %v618 = vadd.f32 %v157, %v617
    %v619 = vpop.f32.mrb[0].mxu0
    %v620 = vadd.f32 %v161, %v619
    %621 = vmatprep.mubr.bf16.mxu0 0
    %622 = vmatmul.mubr.bf16.gmra.mrb[0].mxu0 %v325
    %v623 = vpop.f32.mrb[0].mxu0
    %v624 = vadd.f32 %v157, %v623
    %v625 = vpop.f32.mrb[0].mxu0
    %v626 = vadd.f32 %v161, %v625
    %v627 = vpop.f32.mrb[0].mxu0
    %v628 = vadd.f32 %v157, %v627
    %v629 = vpop.f32.mrb[0].mxu0
    %v630 = vadd.f32 %v161, %v629
    %631 = vmatprep.mubr.bf16.mxu0 0
    %632 = vmatmul.mubr.bf16.gmra.mrb[0].mxu0 %v328
    %v633 = vpop.f32.mrb[0].mxu0
    %v634 = vadd.f32 %v157, %v633
    %v635 = vpop.f32.mrb[0].mxu0
    %v636 = vadd.f32 %v161, %v635
    %v637 = vpop.f32.mrb[0].mxu0
    %v638 = vadd.f32 %v157, %v637
    %v639 = vpop.f32.mrb[0].mxu0
    %v640 = vadd.f32 %v161, %v639
    %641 = vmatprep.mubr.bf16.mxu0 0
    %642 = vmatmul.mubr.bf16.gmra.mrb[0].mxu0 %v331
    %v643 = vpop.f32.mrb[0].mxu0
    %v644 = vadd.f32 %v157, %v643
    %v645 = vpop.f32.mrb[0].mxu0
    %v646 = vadd.f32 %v161, %v645
    %v647 = vpop.f32.mrb[0].mxu0
    %v648 = vadd.f32 %v157, %v647
    %v649 = vpop.f32.mrb[0].mxu0
    %v650 = vadd.f32 %v161, %v649
    %651 = vmatprep.mubr.bf16.mxu0 0
    %652 = vmatmul.mubr.bf16.gmra.mrb[0].mxu0 %v334
    %v653 = vpop.f32.mrb[0].mxu0
    %v654 = vadd.f32 %v157, %v653
    %v655 = vpop.f32.mrb[0].mxu0
    %v656 = vadd.f32 %v161, %v655
    %v657 = vpop.f32.mrb[0].mxu0
    %v658 = vadd.f32 %v157, %v657
    %v659 = vpop.f32.mrb[0].mxu0
    %v660 = vadd.f32 %v161, %v659
    %661 = vdwg.mxu0
    %662 = vmatprep.subr.bf16.mxu0 %v253
    %663 = vmatpush1.bf16.msra.mxu0 %v252
    %664 = vmatprep.subr.bf16.mxu0 %v259
    %665 = vmatpush1.bf16.msra.mxu0 %v258
    %666 = vmatprep.subr.bf16.mxu0 %v265
    %667 = vmatpush1.bf16.msra.mxu0 %v264
    %668 = vmatprep.subr.bf16.mxu0 %v271
    %669 = vmatpush1.bf16.msra.mxu0 %v270
    %670 = vmatprep.subr.bf16.mxu0 0
    %671 = vmatpush1.bf16.msra.mxu0 0
    %672 = vmatprep.subr.bf16.mxu0 0
    %673 = vmatpush1.bf16.msra.mxu0 0
    %674 = vmatprep.subr.bf16.mxu0 0
    %675 = vmatpush1.bf16.msra.mxu0 0
    %676 = vmatprep.subr.bf16.mxu0 0
    %677 = vmatpush1.bf16.msra.mxu0 0
    %678 = vmatprep.subr.bf16.mxu0 0
    %679 = vmatpush1.bf16.msra.mxu0 0
    %680 = vmatprep.subr.bf16.mxu0 0
    %681 = vmatpush1.bf16.msra.mxu0 0
    %682 = vmatprep.subr.bf16.mxu0 0
    %683 = vmatpush1.bf16.msra.mxu0 0
    %684 = vmatprep.subr.bf16.mxu0 0
    %685 = vmatpush1.bf16.msra.mxu0 0
    %686 = vmatprep.subr.bf16.mxu0 0
    %687 = vmatpush1.bf16.msra.mxu0 0
    %688 = vmatprep.subr.bf16.mxu0 0
    %689 = vmatpush1.bf16.msra.mxu0 0
    %690 = vmatprep.subr.bf16.mxu0 0
    %691 = vmatpush1.bf16.msra.mxu0 0
    %692 = vmatprep.subr.bf16.mxu0 0
    %693 = vmatpush1.bf16.msra.mxu0 0
    %694 = vmatprep.mubr.bf16.mxu0 0
    %695 = vmatmul.mubr.bf16.gmra.mrb[0].mxu0 %v298
    %v696 = vpop.f32.mrb[0].mxu0
    %v697 = vadd.f32 %v165, %v696
    %v698 = vpop.f32.mrb[0].mxu0
    %v699 = vadd.f32 %v169, %v698
    %v700 = vpop.f32.mrb[0].mxu0
    %v701 = vadd.f32 %v165, %v700
    %v702 = vpop.f32.mrb[0].mxu0
    %v703 = vadd.f32 %v169, %v702
    %704 = vmatprep.mubr.bf16.mxu0 0
    %705 = vmatmul.mubr.bf16.gmra.mrb[0].mxu0 %v301
    %v706 = vpop.f32.mrb[0].mxu0
    %v707 = vadd.f32 %v165, %v706
    %v708 = vpop.f32.mrb[0].mxu0
    %v709 = vadd.f32 %v169, %v708
    %v710 = vpop.f32.mrb[0].mxu0
    %v711 = vadd.f32 %v165, %v710
    %v712 = vpop.f32.mrb[0].mxu0
    %v713 = vadd.f32 %v169, %v712
    %714 = vmatprep.mubr.bf16.mxu0 0
    %715 = vmatmul.mubr.bf16.gmra.mrb[0].mxu0 %v304
    %v716 = vpop.f32.mrb[0].mxu0
    %v717 = vadd.f32 %v165, %v716
    %v718 = vpop.f32.mrb[0].mxu0
    %v719 = vadd.f32 %v169, %v718
    %v720 = vpop.f32.mrb[0].mxu0
    %v721 = vadd.f32 %v165, %v720
    %v722 = vpop.f32.mrb[0].mxu0
    %v723 = vadd.f32 %v169, %v722
    %724 = vmatprep.mubr.bf16.mxu0 0
    %725 = vmatmul.mubr.bf16.gmra.mrb[0].mxu0 %v307
    %v726 = vpop.f32.mrb[0].mxu0
    %v727 = vadd.f32 %v165, %v726
    %v728 = vpop.f32.mrb[0].mxu0
    %v729 = vadd.f32 %v169, %v728
    %v730 = vpop.f32.mrb[0].mxu0
    %v731 = vadd.f32 %v165, %v730
    %v732 = vpop.f32.mrb[0].mxu0
    %v733 = vadd.f32 %v169, %v732
    %734 = vmatprep.mubr.bf16.mxu0 0
    %735 = vmatmul.mubr.bf16.gmra.mrb[0].mxu0 %v310
    %v736 = vpop.f32.mrb[0].mxu0
    %v737 = vadd.f32 %v165, %v736
    %v738 = vpop.f32.mrb[0].mxu0
    %v739 = vadd.f32 %v169, %v738
    %v740 = vpop.f32.mrb[0].mxu0
    %v741 = vadd.f32 %v165, %v740
    %v742 = vpop.f32.mrb[0].mxu0
    %v743 = vadd.f32 %v169, %v742
    %744 = vmatprep.mubr.bf16.mxu0 0
    %745 = vmatmul.mubr.bf16.gmra.mrb[0].mxu0 %v313
    %v746 = vpop.f32.mrb[0].mxu0
    %v747 = vadd.f32 %v165, %v746
    %v748 = vpop.f32.mrb[0].mxu0
    %v749 = vadd.f32 %v169, %v748
    %v750 = vpop.f32.mrb[0].mxu0
    %v751 = vadd.f32 %v165, %v750
    %v752 = vpop.f32.mrb[0].mxu0
    %v753 = vadd.f32 %v169, %v752
    %754 = vmatprep.mubr.bf16.mxu0 0
    %755 = vmatmul.mubr.bf16.gmra.mrb[0].mxu0 %v316
    %v756 = vpop.f32.mrb[0].mxu0
    %v757 = vadd.f32 %v165, %v756
    %v758 = vpop.f32.mrb[0].mxu0
    %v759 = vadd.f32 %v169, %v758
    %v760 = vpop.f32.mrb[0].mxu0
    %v761 = vadd.f32 %v165, %v760
    %v762 = vpop.f32.mrb[0].mxu0
    %v763 = vadd.f32 %v169, %v762
    %764 = vmatprep.mubr.bf16.mxu0 0
    %765 = vmatmul.mubr.bf16.gmra.mrb[0].mxu0 %v319
    %v766 = vpop.f32.mrb[0].mxu0
    %v767 = vadd.f32 %v165, %v766
    %v768 = vpop.f32.mrb[0].mxu0
    %v769 = vadd.f32 %v169, %v768
    %v770 = vpop.f32.mrb[0].mxu0
    %v771 = vadd.f32 %v165, %v770
    %v772 = vpop.f32.mrb[0].mxu0
    %v773 = vadd.f32 %v169, %v772
    %774 = vmatprep.mubr.bf16.mxu0 0
    %775 = vmatmul.mubr.bf16.gmra.mrb[0].mxu0 %v322
    %v776 = vpop.f32.mrb[0].mxu0
    %v777 = vadd.f32 %v165, %v776
    %v778 = vpop.f32.mrb[0].mxu0
    %v779 = vadd.f32 %v169, %v778
    %v780 = vpop.f32.mrb[0].mxu0
    %v781 = vadd.f32 %v165, %v780
    %v782 = vpop.f32.mrb[0].mxu0
    %v783 = vadd.f32 %v169, %v782
    %784 = vmatprep.mubr.bf16.mxu0 0
    %785 = vmatmul.mubr.bf16.gmra.mrb[0].mxu0 %v325
    %v786 = vpop.f32.mrb[0].mxu0
    %v787 = vadd.f32 %v165, %v786
    %v788 = vpop.f32.mrb[0].mxu0
    %v789 = vadd.f32 %v169, %v788
    %v790 = vpop.f32.mrb[0].mxu0
    %v791 = vadd.f32 %v165, %v790
    %v792 = vpop.f32.mrb[0].mxu0
    %v793 = vadd.f32 %v169, %v792
    %794 = vmatprep.mubr.bf16.mxu0 0
    %795 = vmatmul.mubr.bf16.gmra.mrb[0].mxu0 %v328
    %v796 = vpop.f32.mrb[0].mxu0
    %v797 = vadd.f32 %v165, %v796
    %v798 = vpop.f32.mrb[0].mxu0
    %v799 = vadd.f32 %v169, %v798
    %v800 = vpop.f32.mrb[0].mxu0
    %v801 = vadd.f32 %v165, %v800
    %v802 = vpop.f32.mrb[0].mxu0
    %v803 = vadd.f32 %v169, %v802
    %804 = vmatprep.mubr.bf16.mxu0 0
    %805 = vmatmul.mubr.bf16.gmra.mrb[0].mxu0 %v331
    %v806 = vpop.f32.mrb[0].mxu0
    %v807 = vadd.f32 %v165, %v806
    %v808 = vpop.f32.mrb[0].mxu0
    %v809 = vadd.f32 %v169, %v808
    %v810 = vpop.f32.mrb[0].mxu0
    %v811 = vadd.f32 %v165, %v810
    %v812 = vpop.f32.mrb[0].mxu0
    %v813 = vadd.f32 %v169, %v812
    %814 = vmatprep.mubr.bf16.mxu0 0
    %815 = vmatmul.mubr.bf16.gmra.mrb[0].mxu0 %v334
    %v816 = vpop.f32.mrb[0].mxu0
    %v817 = vadd.f32 %v165, %v816
    %v818 = vpop.f32.mrb[0].mxu0
    %v819 = vadd.f32 %v169, %v818
    %v820 = vpop.f32.mrb[0].mxu0
    %v821 = vadd.f32 %v165, %v820
    %v822 = vpop.f32.mrb[0].mxu0
    %v823 = vadd.f32 %v169, %v822
    %824 = vdwg.mxu0
    %v825 = vmax.f32 %v371, 0.0
    %v826 = vmax.f32 %v373, 0.0
    %v827 = vmax.f32 %v534, 0.0
    %v828 = vmax.f32 %v536, 0.0
    %v829 = vmax.f32 %v697, 0.0
    %v830 = vmax.f32 %v699, 0.0
    %v831 = vmax.f32 %v375, 0.0
    %v832 = vmax.f32 %v377, 0.0
    %v833 = vmax.f32 %v538, 0.0
    %v834 = vmax.f32 %v540, 0.0
    %v835 = vmax.f32 %v701, 0.0
    %v836 = vmax.f32 %v703, 0.0
    %v837 = vmax.f32 %v381, 0.0
    %v838 = vmax.f32 %v383, 0.0
    %v839 = vmax.f32 %v544, 0.0
    %v840 = vmax.f32 %v546, 0.0
    %v841 = vmax.f32 %v707, 0.0
    %v842 = vmax.f32 %v709, 0.0
    %v843 = vmax.f32 %v385, 0.0
    %v844 = vmax.f32 %v387, 0.0
    %v845 = vmax.f32 %v548, 0.0
    %v846 = vmax.f32 %v550, 0.0
    %v847 = vmax.f32 %v711, 0.0
    %v848 = vmax.f32 %v713, 0.0
    %v849 = vmax.f32 %v391, 0.0
    %v850 = vmax.f32 %v393, 0.0
    %v851 = vmax.f32 %v554, 0.0
    %v852 = vmax.f32 %v556, 0.0
    %v853 = vmax.f32 %v717, 0.0
    %v854 = vmax.f32 %v719, 0.0
    %v855 = vmax.f32 %v395, 0.0
    %v856 = vmax.f32 %v397, 0.0
    %v857 = vmax.f32 %v558, 0.0
    %v858 = vmax.f32 %v560, 0.0
    %v859 = vmax.f32 %v721, 0.0
    %v860 = vmax.f32 %v723, 0.0
    %v861 = vmax.f32 %v401, 0.0
    %v862 = vmax.f32 %v403, 0.0
    %v863 = vmax.f32 %v564, 0.0
    %v864 = vmax.f32 %v566, 0.0
    %v865 = vmax.f32 %v727, 0.0
    %v866 = vmax.f32 %v729, 0.0
    %v867 = vmax.f32 %v405, 0.0
    %v868 = vmax.f32 %v407, 0.0
    %v869 = vmax.f32 %v568, 0.0
    %v870 = vmax.f32 %v570, 0.0
    %v871 = vmax.f32 %v731, 0.0
    %v872 = vmax.f32 %v733, 0.0
    %v873 = vmax.f32 %v411, 0.0
    %v874 = vmax.f32 %v413, 0.0
    %v875 = vmax.f32 %v574, 0.0
    %v876 = vmax.f32 %v576, 0.0
    %v877 = vmax.f32 %v737, 0.0
    %v878 = vmax.f32 %v739, 0.0
    %v879 = vmax.f32 %v415, 0.0
    %v880 = vmax.f32 %v417, 0.0
    %v881 = vmax.f32 %v578, 0.0
    %v882 = vmax.f32 %v580, 0.0
    %v883 = vmax.f32 %v741, 0.0
    %v884 = vmax.f32 %v743, 0.0
    %v885 = vmax.f32 %v421, 0.0
    %v886 = vmax.f32 %v423, 0.0
    %v887 = vmax.f32 %v584, 0.0
    %v888 = vmax.f32 %v586, 0.0
    %v889 = vmax.f32 %v747, 0.0
    %v890 = vmax.f32 %v749, 0.0
    %v891 = vmax.f32 %v425, 0.0
    %v892 = vmax.f32 %v427, 0.0
    %v893 = vmax.f32 %v588, 0.0
    %v894 = vmax.f32 %v590, 0.0
    %v895 = vmax.f32 %v751, 0.0
    %v896 = vmax.f32 %v753, 0.0
    %v897 = vmax.f32 %v431, 0.0
    %v898 = vmax.f32 %v433, 0.0
    %v899 = vmax.f32 %v594, 0.0
    %v900 = vmax.f32 %v596, 0.0
    %v901 = vmax.f32 %v757, 0.0
    %v902 = vmax.f32 %v759, 0.0
    %v903 = vmax.f32 %v435, 0.0
    %v904 = vmax.f32 %v437, 0.0
    %v905 = vmax.f32 %v598, 0.0
    %v906 = vmax.f32 %v600, 0.0
    %v907 = vmax.f32 %v761, 0.0
    %v908 = vmax.f32 %v763, 0.0
    %v909 = vmax.f32 %v441, 0.0
    %v910 = vmax.f32 %v443, 0.0
    %v911 = vmax.f32 %v604, 0.0
    %v912 = vmax.f32 %v606, 0.0
    %v913 = vmax.f32 %v767, 0.0
    %v914 = vmax.f32 %v769, 0.0
    %v915 = vmax.f32 %v445, 0.0
    %v916 = vmax.f32 %v447, 0.0
    %v917 = vmax.f32 %v608, 0.0
    %v918 = vmax.f32 %v610, 0.0
    %v919 = vmax.f32 %v771, 0.0
    %v920 = vmax.f32 %v773, 0.0
    %v921 = vmax.f32 %v451, 0.0
    %v922 = vmax.f32 %v453, 0.0
    %v923 = vmax.f32 %v614, 0.0
    %v924 = vmax.f32 %v616, 0.0
    %v925 = vmax.f32 %v777, 0.0
    %v926 = vmax.f32 %v779, 0.0
    %v927 = vmax.f32 %v455, 0.0
    %v928 = vmax.f32 %v457, 0.0
    %v929 = vmax.f32 %v618, 0.0
    %v930 = vmax.f32 %v620, 0.0
    %v931 = vmax.f32 %v781, 0.0
    %v932 = vmax.f32 %v783, 0.0
    %v933 = vmax.f32 %v461, 0.0
    %v934 = vmax.f32 %v463, 0.0
    %v935 = vmax.f32 %v624, 0.0
    %v936 = vmax.f32 %v626, 0.0
    %v937 = vmax.f32 %v787, 0.0
    %v938 = vmax.f32 %v789, 0.0
    %v939 = vmax.f32 %v465, 0.0
    %v940 = vmax.f32 %v467, 0.0
    %v941 = vmax.f32 %v628, 0.0
    %v942 = vmax.f32 %v630, 0.0
    %v943 = vmax.f32 %v791, 0.0
    %v944 = vmax.f32 %v793, 0.0
    %v945 = vmax.f32 %v471, 0.0
    %v946 = vmax.f32 %v473, 0.0
    %v947 = vmax.f32 %v634, 0.0
    %v948 = vmax.f32 %v636, 0.0
    %v949 = vmax.f32 %v797, 0.0
    %v950 = vmax.f32 %v799, 0.0
    %v951 = vmax.f32 %v475, 0.0
    %v952 = vmax.f32 %v477, 0.0
    %v953 = vmax.f32 %v638, 0.0
    %v954 = vmax.f32 %v640, 0.0
    %v955 = vmax.f32 %v801, 0.0
    %v956 = vmax.f32 %v803, 0.0
    %v957 = vmax.f32 %v481, 0.0
    %v958 = vmax.f32 %v483, 0.0
    %v959 = vmax.f32 %v644, 0.0
    %v960 = vmax.f32 %v646, 0.0
    %v961 = vmax.f32 %v807, 0.0
    %v962 = vmax.f32 %v809, 0.0
    %v963 = vmax.f32 %v485, 0.0
    %v964 = vmax.f32 %v487, 0.0
    %v965 = vmax.f32 %v648, 0.0
    %v966 = vmax.f32 %v650, 0.0
    %v967 = vmax.f32 %v811, 0.0
    %v968 = vmax.f32 %v813, 0.0
    %v969 = vmax.f32 %v491, 0.0
    %v970 = vmax.f32 %v493, 0.0
    %v971 = vmax.f32 %v654, 0.0
    %v972 = vmax.f32 %v656, 0.0
    %v973 = vmax.f32 %v817, 0.0
    %v974 = vmax.f32 %v819, 0.0
    %v975 = vmax.f32 %v495, 0.0
    %v976 = vmax.f32 %v497, 0.0
    %v977 = vmax.f32 %v658, 0.0
    %v978 = vmax.f32 %v660, 0.0
    %v979 = vmax.f32 %v821, 0.0
    %v980 = vmax.f32 %v823, 0.0
    %v981 = vpack.c.bf16 %v831, %v825
    %v982 = vpack.c.bf16 %v832, %v826
    %v983 = vpack.c.bf16 %v833, %v827
    %v984 = vpack.c.bf16 %v834, %v828
    %v985 = vpack.c.bf16 %v835, %v829
    %v986 = vpack.c.bf16 %v836, %v830
    %v987 = vpack.c.bf16 %v843, %v837
    %v988 = vpack.c.bf16 %v844, %v838
    %v989 = vpack.c.bf16 %v845, %v839
    %v990 = vpack.c.bf16 %v846, %v840
    %v991 = vpack.c.bf16 %v847, %v841
    %v992 = vpack.c.bf16 %v848, %v842
    %v993 = vpack.c.bf16 %v855, %v849
    %v994 = vpack.c.bf16 %v856, %v850
    %v995 = vpack.c.bf16 %v857, %v851
    %v996 = vpack.c.bf16 %v858, %v852
    %v997 = vpack.c.bf16 %v859, %v853
    %v998 = vpack.c.bf16 %v860, %v854
    %v999 = vpack.c.bf16 %v867, %v861
    %v1000 = vpack.c.bf16 %v868, %v862
    %v1001 = vpack.c.bf16 %v869, %v863
    %v1002 = vpack.c.bf16 %v870, %v864
    %v1003 = vpack.c.bf16 %v871, %v865
    %v1004 = vpack.c.bf16 %v872, %v866
    %v1005 = vpack.c.bf16 %v879, %v873
    %v1006 = vpack.c.bf16 %v880, %v874
    %v1007 = vpack.c.bf16 %v881, %v875
    %v1008 = vpack.c.bf16 %v882, %v876
    %v1009 = vpack.c.bf16 %v883, %v877
    %v1010 = vpack.c.bf16 %v884, %v878
    %v1011 = vpack.c.bf16 %v891, %v885
    %v1012 = vpack.c.bf16 %v892, %v886
    %v1013 = vpack.c.bf16 %v893, %v887
    %v1014 = vpack.c.bf16 %v894, %v888
    %v1015 = vpack.c.bf16 %v895, %v889
    %v1016 = vpack.c.bf16 %v896, %v890
    %v1017 = vpack.c.bf16 %v903, %v897
    %v1018 = vpack.c.bf16 %v904, %v898
    %v1019 = vpack.c.bf16 %v905, %v899
    %v1020 = vpack.c.bf16 %v906, %v900
    %v1021 = vpack.c.bf16 %v907, %v901
    %v1022 = vpack.c.bf16 %v908, %v902
    %v1023 = vpack.c.bf16 %v915, %v909
    %v1024 = vpack.c.bf16 %v916, %v910
    %v1025 = vpack.c.bf16 %v917, %v911
    %v1026 = vpack.c.bf16 %v918, %v912
    %v1027 = vpack.c.bf16 %v919, %v913
    %v1028 = vpack.c.bf16 %v920, %v914
    %v1029 = vpack.c.bf16 %v927, %v921
    %v1030 = vpack.c.bf16 %v928, %v922
    %v1031 = vpack.c.bf16 %v929, %v923
    %v1032 = vpack.c.bf16 %v930, %v924
    %v1033 = vpack.c.bf16 %v931, %v925
    %v1034 = vpack.c.bf16 %v932, %v926
    %v1035 = vpack.c.bf16 %v939, %v933
    %v1036 = vpack.c.bf16 %v940, %v934
    %v1037 = vpack.c.bf16 %v941, %v935
    %v1038 = vpack.c.bf16 %v942, %v936
    %v1039 = vpack.c.bf16 %v943, %v937
    %v1040 = vpack.c.bf16 %v944, %v938
    %v1041 = vpack.c.bf16 %v951, %v945
    %v1042 = vpack.c.bf16 %v952, %v946
    %v1043 = vpack.c.bf16 %v953, %v947
    %v1044 = vpack.c.bf16 %v954, %v948
    %v1045 = vpack.c.bf16 %v955, %v949
    %v1046 = vpack.c.bf16 %v956, %v950
    %v1047 = vpack.c.bf16 %v963, %v957
    %v1048 = vpack.c.bf16 %v964, %v958
    %v1049 = vpack.c.bf16 %v965, %v959
    %v1050 = vpack.c.bf16 %v966, %v960
    %v1051 = vpack.c.bf16 %v967, %v961
    %v1052 = vpack.c.bf16 %v968, %v962
    %v1053 = vpack.c.bf16 %v975, %v969
    %v1054 = vpack.c.bf16 %v976, %v970
    %v1055 = vpack.c.bf16 %v977, %v971
    %v1056 = vpack.c.bf16 %v978, %v972
    %v1057 = vpack.c.bf16 %v979, %v973
    %v1058 = vpack.c.bf16 %v980, %v974
    %v1059 = vld [vmem:[#allocation3] sm:$0xff]
    %v1060 = vld [vmem:[#allocation3 + $0x8] sm:$0xff]
    %v1061 = vld [vmem:[#allocation3 + $0x10] sm:$0xff]
    %v1062 = vld [vmem:[#allocation3 + $0x18] sm:$0xff]
    %v1063 = vld [vmem:[#allocation3 + $0x20] sm:$0xff]
    %v1064 = vld [vmem:[#allocation3 + $0x28] sm:$0xff]
    %v1065 = vld [vmem:[#allocation3 + $0x30] sm:$0xff]
    %v1066 = vld [vmem:[#allocation3 + $0x38] sm:$0xff]
    %v1067 = vld [vmem:[#allocation3 + $0x40] sm:$0xff]
    %v1068 = vld [vmem:[#allocation3 + $0x48] sm:$0xff]
    %v1069 = vld [vmem:[#allocation3 + $0x50] sm:$0xff]
    %v1070 = vld [vmem:[#allocation3 + $0x58] sm:$0xff]
    %v1071 = vld [vmem:[#allocation3 + $0x60] sm:$0xff]
    %v1072 = vld [vmem:[#allocation3 + $0x68] sm:$0xff]
    %v1073 = vld [vmem:[#allocation3 + $0x70] sm:$0xff]
    %v1074 = vld [vmem:[#allocation3 + $0x78] sm:$0xff]
    %v1075 = vld [vmem:[#allocation3 + $0x80] sm:$0xff]
    %v1076 = vld [vmem:[#allocation3 + $0x88] sm:$0xff]
    %v1077 = vld [vmem:[#allocation3 + $0x90] sm:$0xff]
    %v1078 = vld [vmem:[#allocation3 + $0x98] sm:$0xff]
    %v1079 = vld [vmem:[#allocation3 + $0xa0] sm:$0xff]
    %v1080 = vld [vmem:[#allocation3 + $0xa8] sm:$0xff]
    %v1081 = vld [vmem:[#allocation3 + $0xb0] sm:$0xff]
    %v1082 = vld [vmem:[#allocation3 + $0xb8] sm:$0xff]
    %v1083 = vld [vmem:[#allocation3 + $0xc0] sm:$0xff]
    %v1084 = vld [vmem:[#allocation3 + $0xc8] sm:$0xff]
    %v1085 = vld [vmem:[#allocation3 + $0xd0] sm:$0xff]
    %v1086 = vld [vmem:[#allocation3 + $0xd8] sm:$0xff]
    %v1087 = vld [vmem:[#allocation3 + $0xe0] sm:$0xff]
    %v1088 = vld [vmem:[#allocation3 + $0xe8] sm:$0xff]
    %v1089 = vld [vmem:[#allocation3 + $0xf0] sm:$0xff]
    %v1090 = vld [vmem:[#allocation3 + $0xf8] sm:$0xff]
    %v1091 = vld [vmem:[#allocation3 + $0x100] sm:$0xff]
    %v1092 = vld [vmem:[#allocation3 + $0x108] sm:$0xff]
    %v1093 = vld [vmem:[#allocation3 + $0x110] sm:$0xff]
    %v1094 = vld [vmem:[#allocation3 + $0x118] sm:$0xff]
    %v1095 = vld [vmem:[#allocation3 + $0x120] sm:$0xff]
    %v1096 = vld [vmem:[#allocation3 + $0x128] sm:$0xff]
    %v1097 = vld [vmem:[#allocation3 + $0x130] sm:$0xff]
    %v1098 = vld [vmem:[#allocation3 + $0x138] sm:$0xff]
    %v1099 = vld [vmem:[#allocation3 + $0x140] sm:$0xff]
    %v1100 = vld [vmem:[#allocation3 + $0x148] sm:$0xff]
    %v1101 = vld [vmem:[#allocation3 + $0x150] sm:$0xff]
    %v1102 = vld [vmem:[#allocation3 + $0x158] sm:$0xff]
    %v1103 = vld [vmem:[#allocation3 + $0x160] sm:$0xff]
    %v1104 = vld [vmem:[#allocation3 + $0x168] sm:$0xff]
    %v1105 = vld [vmem:[#allocation3 + $0x170] sm:$0xff]
    %v1106 = vld [vmem:[#allocation3 + $0x178] sm:$0xff]
    %v1107 = vld [vmem:[#allocation3 + $0x180] sm:$0xff]
    %v1108 = vld [vmem:[#allocation3 + $0x188] sm:$0xff]
    %v1109 = vld [vmem:[#allocation3 + $0x190] sm:$0xff]
    %v1110 = vld [vmem:[#allocation3 + $0x198] sm:$0xff]
    %v1111 = vld [vmem:[#allocation3 + $0x1a0] sm:$0xff]
    %v1112 = vld [vmem:[#allocation3 + $0x1a8] sm:$0xff]
    %v1113 = vld [vmem:[#allocation3 + $0x1b0] sm:$0xff]
    %v1114 = vld [vmem:[#allocation3 + $0x1b8] sm:$0xff]
    %v1115 = vld [vmem:[#allocation3 + $0x1c0] sm:$0xff]
    %v1116 = vld [vmem:[#allocation3 + $0x1c8] sm:$0xff]
    %v1117 = vld [vmem:[#allocation3 + $0x1d0] sm:$0xff]
    %v1118 = vld [vmem:[#allocation3 + $0x1d8] sm:$0xff]
    %v1119 = vld [vmem:[#allocation3 + $0x1e0] sm:$0xff]
    %v1120 = vld [vmem:[#allocation3 + $0x1e8] sm:$0xff]
    %v1121 = vld [vmem:[#allocation3 + $0x1f0] sm:$0xff]
    %v1122 = vld [vmem:[#allocation3 + $0x1f8] sm:$0xff]
    %v1123 = vld [vmem:[%s4] sm:$0x3]
    %v1125 = vlaneseq
    %v1126 = vshrl.u32 %v1125, 7
    %v1127 = vsub.s32 0, %v1126
    %v1128 = vrot.slane %v1123, %v1127
    %v1129 = vlaneseq
    %v1130 = vshrl.u32 %v1129, 7
    %v1131 = vsub.s32 1, %v1130
    %v1132 = vrot.slane %v1123, %v1131
    %v1199 = vunpack.c.l.b16 %v1059
    %v1200 = vunpack.c.h.b16 %v1059
    %v1201 = vunpack.c.l.b16 %v1060
    %v1202 = vunpack.c.h.b16 %v1060
    %v1203 = vunpack.c.l.b16 %v1061
    %v1204 = vunpack.c.h.b16 %v1061
    %v1205 = vunpack.c.l.b16 %v1062
    %v1206 = vunpack.c.h.b16 %v1062
    %v1207 = vunpack.c.l.b16 %v1063
    %v1208 = vunpack.c.h.b16 %v1063
    %v1209 = vunpack.c.l.b16 %v1064
    %v1210 = vunpack.c.h.b16 %v1064
    %v1211 = vunpack.c.l.b16 %v1065
    %v1212 = vunpack.c.h.b16 %v1065
    %v1213 = vunpack.c.l.b16 %v1066
    %v1214 = vunpack.c.h.b16 %v1066
    %v1215 = vunpack.c.l.b16 %v1067
    %v1216 = vunpack.c.h.b16 %v1067
    %v1217 = vunpack.c.l.b16 %v1068
    %v1218 = vunpack.c.h.b16 %v1068
    %v1219 = vunpack.c.l.b16 %v1069
    %v1220 = vunpack.c.h.b16 %v1069
    %v1221 = vunpack.c.l.b16 %v1070
    %v1222 = vunpack.c.h.b16 %v1070
    %v1223 = vunpack.c.l.b16 %v1071
    %v1224 = vunpack.c.h.b16 %v1071
    %v1225 = vunpack.c.l.b16 %v1072
    %v1226 = vunpack.c.h.b16 %v1072
    %v1227 = vunpack.c.l.b16 %v1073
    %v1228 = vunpack.c.h.b16 %v1073
    %v1229 = vunpack.c.l.b16 %v1074
    %v1230 = vunpack.c.h.b16 %v1074
    %v1231 = vunpack.c.l.b16 %v1075
    %v1232 = vunpack.c.h.b16 %v1075
    %v1233 = vunpack.c.l.b16 %v1076
    %v1234 = vunpack.c.h.b16 %v1076
    %v1235 = vunpack.c.l.b16 %v1077
    %v1236 = vunpack.c.h.b16 %v1077
    %v1237 = vunpack.c.l.b16 %v1078
    %v1238 = vunpack.c.h.b16 %v1078
    %v1239 = vunpack.c.l.b16 %v1079
    %v1240 = vunpack.c.h.b16 %v1079
    %v1241 = vunpack.c.l.b16 %v1080
    %v1242 = vunpack.c.h.b16 %v1080
    %v1243 = vunpack.c.l.b16 %v1081
    %v1244 = vunpack.c.h.b16 %v1081
    %v1245 = vunpack.c.l.b16 %v1082
    %v1246 = vunpack.c.h.b16 %v1082
    %v1247 = vunpack.c.l.b16 %v1083
    %v1248 = vunpack.c.h.b16 %v1083
    %v1249 = vunpack.c.l.b16 %v1084
    %v1250 = vunpack.c.h.b16 %v1084
    %v1251 = vunpack.c.l.b16 %v1085
    %v1252 = vunpack.c.h.b16 %v1085
    %v1253 = vunpack.c.l.b16 %v1086
    %v1254 = vunpack.c.h.b16 %v1086
    %v1255 = vunpack.c.l.b16 %v1087
    %v1256 = vunpack.c.h.b16 %v1087
    %v1257 = vunpack.c.l.b16 %v1088
    %v1258 = vunpack.c.h.b16 %v1088
    %v1259 = vunpack.c.l.b16 %v1089
    %v1260 = vunpack.c.h.b16 %v1089
    %v1261 = vunpack.c.l.b16 %v1090
    %v1262 = vunpack.c.h.b16 %v1090
    %v1263 = vunpack.c.l.b16 %v1091
    %v1264 = vunpack.c.h.b16 %v1091
    %v1265 = vunpack.c.l.b16 %v1092
    %v1266 = vunpack.c.h.b16 %v1092
    %v1267 = vunpack.c.l.b16 %v1093
    %v1268 = vunpack.c.h.b16 %v1093
    %v1269 = vunpack.c.l.b16 %v1094
    %v1270 = vunpack.c.h.b16 %v1094
    %v1271 = vunpack.c.l.b16 %v1095
    %v1272 = vunpack.c.h.b16 %v1095
    %v1273 = vunpack.c.l.b16 %v1096
    %v1274 = vunpack.c.h.b16 %v1096
    %v1275 = vunpack.c.l.b16 %v1097
    %v1276 = vunpack.c.h.b16 %v1097
    %v1277 = vunpack.c.l.b16 %v1098
    %v1278 = vunpack.c.h.b16 %v1098
    %v1279 = vunpack.c.l.b16 %v1099
    %v1280 = vunpack.c.h.b16 %v1099
    %v1281 = vunpack.c.l.b16 %v1100
    %v1282 = vunpack.c.h.b16 %v1100
    %v1283 = vunpack.c.l.b16 %v1101
    %v1284 = vunpack.c.h.b16 %v1101
    %v1285 = vunpack.c.l.b16 %v1102
    %v1286 = vunpack.c.h.b16 %v1102
    %v1287 = vunpack.c.l.b16 %v1103
    %v1288 = vunpack.c.h.b16 %v1103
    %v1289 = vunpack.c.l.b16 %v1104
    %v1290 = vunpack.c.h.b16 %v1104
    %v1291 = vunpack.c.l.b16 %v1105
    %v1292 = vunpack.c.h.b16 %v1105
    %v1293 = vunpack.c.l.b16 %v1106
    %v1294 = vunpack.c.h.b16 %v1106
    %v1295 = vunpack.c.l.b16 %v1107
    %v1296 = vunpack.c.h.b16 %v1107
    %v1297 = vunpack.c.l.b16 %v1108
    %v1298 = vunpack.c.h.b16 %v1108
    %v1299 = vunpack.c.l.b16 %v1109
    %v1300 = vunpack.c.h.b16 %v1109
    %v1301 = vunpack.c.l.b16 %v1110
    %v1302 = vunpack.c.h.b16 %v1110
    %v1303 = vunpack.c.l.b16 %v1111
    %v1304 = vunpack.c.h.b16 %v1111
    %v1305 = vunpack.c.l.b16 %v1112
    %v1306 = vunpack.c.h.b16 %v1112
    %v1307 = vunpack.c.l.b16 %v1113
    %v1308 = vunpack.c.h.b16 %v1113
    %v1309 = vunpack.c.l.b16 %v1114
    %v1310 = vunpack.c.h.b16 %v1114
    %v1311 = vunpack.c.l.b16 %v1115
    %v1312 = vunpack.c.h.b16 %v1115
    %v1313 = vunpack.c.l.b16 %v1116
    %v1314 = vunpack.c.h.b16 %v1116
    %v1315 = vunpack.c.l.b16 %v1117
    %v1316 = vunpack.c.h.b16 %v1117
    %v1317 = vunpack.c.l.b16 %v1118
    %v1318 = vunpack.c.h.b16 %v1118
    %v1319 = vunpack.c.l.b16 %v1119
    %v1320 = vunpack.c.h.b16 %v1119
    %v1321 = vunpack.c.l.b16 %v1120
    %v1322 = vunpack.c.h.b16 %v1120
    %v1323 = vunpack.c.l.b16 %v1121
    %v1324 = vunpack.c.h.b16 %v1121
    %v1325 = vunpack.c.l.b16 %v1122
    %v1326 = vunpack.c.h.b16 %v1122
    %v1327 = vpack.c.b16 %v1201, %v1199
    %v1328 = vpack.c.b16 %v1202, %v1200
    %v1329 = vpack.c.b16 %v1205, %v1203
    %v1330 = vpack.c.b16 %v1206, %v1204
    %v1331 = vpack.c.b16 %v1209, %v1207
    %v1332 = vpack.c.b16 %v1210, %v1208
    %v1333 = vpack.c.b16 %v1213, %v1211
    %v1334 = vpack.c.b16 %v1214, %v1212
    %v1335 = vpack.c.b16 %v1217, %v1215
    %v1336 = vpack.c.b16 %v1218, %v1216
    %v1337 = vpack.c.b16 %v1221, %v1219
    %v1338 = vpack.c.b16 %v1222, %v1220
    %v1339 = vpack.c.b16 %v1225, %v1223
    %v1340 = vpack.c.b16 %v1226, %v1224
    %v1341 = vpack.c.b16 %v1229, %v1227
    %v1342 = vpack.c.b16 %v1230, %v1228
    %v1343 = vpack.c.b16 %v1233, %v1231
    %v1344 = vpack.c.b16 %v1234, %v1232
    %v1345 = vpack.c.b16 %v1237, %v1235
    %v1346 = vpack.c.b16 %v1238, %v1236
    %v1347 = vpack.c.b16 %v1241, %v1239
    %v1348 = vpack.c.b16 %v1242, %v1240
    %v1349 = vpack.c.b16 %v1245, %v1243
    %v1350 = vpack.c.b16 %v1246, %v1244
    %v1351 = vpack.c.b16 %v1249, %v1247
    %v1352 = vpack.c.b16 %v1250, %v1248
    %v1353 = vpack.c.b16 %v1253, %v1251
    %v1354 = vpack.c.b16 %v1254, %v1252
    %v1355 = vpack.c.b16 %v1257, %v1255
    %v1356 = vpack.c.b16 %v1258, %v1256
    %v1357 = vpack.c.b16 %v1261, %v1259
    %v1358 = vpack.c.b16 %v1262, %v1260
    %v1359 = vpack.c.b16 %v1265, %v1263
    %v1360 = vpack.c.b16 %v1266, %v1264
    %v1361 = vpack.c.b16 %v1269, %v1267
    %v1362 = vpack.c.b16 %v1270, %v1268
    %v1363 = vpack.c.b16 %v1273, %v1271
    %v1364 = vpack.c.b16 %v1274, %v1272
    %v1365 = vpack.c.b16 %v1277, %v1275
    %v1366 = vpack.c.b16 %v1278, %v1276
    %v1367 = vpack.c.b16 %v1281, %v1279
    %v1368 = vpack.c.b16 %v1282, %v1280
    %v1369 = vpack.c.b16 %v1285, %v1283
    %v1370 = vpack.c.b16 %v1286, %v1284
    %v1371 = vpack.c.b16 %v1289, %v1287
    %v1372 = vpack.c.b16 %v1290, %v1288
    %v1373 = vpack.c.b16 %v1293, %v1291
    %v1374 = vpack.c.b16 %v1294, %v1292
    %v1375 = vpack.c.b16 %v1297, %v1295
    %v1376 = vpack.c.b16 %v1298, %v1296
    %v1377 = vpack.c.b16 %v1301, %v1299
    %v1378 = vpack.c.b16 %v1302, %v1300
    %v1379 = vpack.c.b16 %v1305, %v1303
    %v1380 = vpack.c.b16 %v1306, %v1304
    %v1381 = vpack.c.b16 %v1309, %v1307
    %v1382 = vpack.c.b16 %v1310, %v1308
    %v1383 = vpack.c.b16 %v1313, %v1311
    %v1384 = vpack.c.b16 %v1314, %v1312
    %v1385 = vpack.c.b16 %v1317, %v1315
    %v1386 = vpack.c.b16 %v1318, %v1316
    %v1387 = vpack.c.b16 %v1321, %v1319
    %v1388 = vpack.c.b16 %v1322, %v1320
    %v1389 = vpack.c.b16 %v1325, %v1323
    %v1390 = vpack.c.b16 %v1326, %v1324
    %1455 = vmatprep.subr.bf16.mxu0 %v1328
    %1456 = vmatpush1.bf16.msra.mxu0 %v1327
    %1457 = vmatprep.subr.bf16.mxu0 %v1330
    %1458 = vmatpush1.bf16.msra.mxu0 %v1329
    %1459 = vmatprep.subr.bf16.mxu0 %v1332
    %1460 = vmatpush1.bf16.msra.mxu0 %v1331
    %1461 = vmatprep.subr.bf16.mxu0 %v1334
    %1462 = vmatpush1.bf16.msra.mxu0 %v1333
    %1463 = vmatprep.subr.bf16.mxu0 %v1336
    %1464 = vmatpush1.bf16.msra.mxu0 %v1335
    %1465 = vmatprep.subr.bf16.mxu0 %v1338
    %1466 = vmatpush1.bf16.msra.mxu0 %v1337
    %1467 = vmatprep.subr.bf16.mxu0 %v1340
    %1468 = vmatpush1.bf16.msra.mxu0 %v1339
    %1469 = vmatprep.subr.bf16.mxu0 %v1342
    %1470 = vmatpush1.bf16.msra.mxu0 %v1341
    %1471 = vmatprep.subr.bf16.mxu0 %v1344
    %1472 = vmatpush1.bf16.msra.mxu0 %v1343
    %1473 = vmatprep.subr.bf16.mxu0 %v1346
    %1474 = vmatpush1.bf16.msra.mxu0 %v1345
    %1475 = vmatprep.subr.bf16.mxu0 %v1348
    %1476 = vmatpush1.bf16.msra.mxu0 %v1347
    %1477 = vmatprep.subr.bf16.mxu0 %v1350
    %1478 = vmatpush1.bf16.msra.mxu0 %v1349
    %1479 = vmatprep.subr.bf16.mxu0 %v1352
    %1480 = vmatpush1.bf16.msra.mxu0 %v1351
    %1481 = vmatprep.subr.bf16.mxu0 %v1354
    %1482 = vmatpush1.bf16.msra.mxu0 %v1353
    %1483 = vmatprep.subr.bf16.mxu0 %v1356
    %1484 = vmatpush1.bf16.msra.mxu0 %v1355
    %1485 = vmatprep.subr.bf16.mxu0 %v1358
    %1486 = vmatpush1.bf16.msra.mxu0 %v1357
    %1487 = vmatprep.mubr.bf16.mxu0 %v982
    %1488 = vmatmul.mubr.bf16.gmra.mrb[0].mxu0 %v981
    %v1489 = vpop.f32.mrb[0].mxu0
    %v1490 = vadd.f32 %v1128, %v1489
    %v1491 = vpop.f32.mrb[0].mxu0
    %v1492 = vadd.f32 %v1132, %v1491
    %v1493 = vpop.f32.mrb[0].mxu0
    %v1494 = vadd.f32 %v1128, %v1493
    %v1495 = vpop.f32.mrb[0].mxu0
    %v1496 = vadd.f32 %v1132, %v1495
    %1497 = vmatprep.mubr.bf16.mxu0 %v988
    %1498 = vmatmul.mubr.bf16.gmra.mrb[0].mxu0 %v987
    %v1499 = vpop.f32.mrb[0].mxu0
    %v1500 = vadd.f32 %v1128, %v1499
    %v1501 = vpop.f32.mrb[0].mxu0
    %v1502 = vadd.f32 %v1132, %v1501
    %v1503 = vpop.f32.mrb[0].mxu0
    %v1504 = vadd.f32 %v1128, %v1503
    %v1505 = vpop.f32.mrb[0].mxu0
    %v1506 = vadd.f32 %v1132, %v1505
    %1507 = vmatprep.mubr.bf16.mxu0 %v994
    %1508 = vmatmul.mubr.bf16.gmra.mrb[0].mxu0 %v993
    %v1509 = vpop.f32.mrb[0].mxu0
    %v1510 = vadd.f32 %v1128, %v1509
    %v1511 = vpop.f32.mrb[0].mxu0
    %v1512 = vadd.f32 %v1132, %v1511
    %v1513 = vpop.f32.mrb[0].mxu0
    %v1514 = vadd.f32 %v1128, %v1513
    %v1515 = vpop.f32.mrb[0].mxu0
    %v1516 = vadd.f32 %v1132, %v1515
    %1517 = vmatprep.mubr.bf16.mxu0 %v1000
    %1518 = vmatmul.mubr.bf16.gmra.mrb[0].mxu0 %v999
    %v1519 = vpop.f32.mrb[0].mxu0
    %v1520 = vadd.f32 %v1128, %v1519
    %v1521 = vpop.f32.mrb[0].mxu0
    %v1522 = vadd.f32 %v1132, %v1521
    %v1523 = vpop.f32.mrb[0].mxu0
    %v1524 = vadd.f32 %v1128, %v1523
    %v1525 = vpop.f32.mrb[0].mxu0
    %v1526 = vadd.f32 %v1132, %v1525
    %1527 = vmatprep.mubr.bf16.mxu0 %v1006
    %1528 = vmatmul.mubr.bf16.gmra.mrb[0].mxu0 %v1005
    %v1529 = vpop.f32.mrb[0].mxu0
    %v1530 = vadd.f32 %v1128, %v1529
    %v1531 = vpop.f32.mrb[0].mxu0
    %v1532 = vadd.f32 %v1132, %v1531
    %v1533 = vpop.f32.mrb[0].mxu0
    %v1534 = vadd.f32 %v1128, %v1533
    %v1535 = vpop.f32.mrb[0].mxu0
    %v1536 = vadd.f32 %v1132, %v1535
    %1537 = vmatprep.mubr.bf16.mxu0 %v1012
    %1538 = vmatmul.mubr.bf16.gmra.mrb[0].mxu0 %v1011
    %v1539 = vpop.f32.mrb[0].mxu0
    %v1540 = vadd.f32 %v1128, %v1539
    %v1541 = vpop.f32.mrb[0].mxu0
    %v1542 = vadd.f32 %v1132, %v1541
    %v1543 = vpop.f32.mrb[0].mxu0
    %v1544 = vadd.f32 %v1128, %v1543
    %v1545 = vpop.f32.mrb[0].mxu0
    %v1546 = vadd.f32 %v1132, %v1545
    %1547 = vmatprep.mubr.bf16.mxu0 %v1018
    %1548 = vmatmul.mubr.bf16.gmra.mrb[0].mxu0 %v1017
    %v1549 = vpop.f32.mrb[0].mxu0
    %v1550 = vadd.f32 %v1128, %v1549
    %v1551 = vpop.f32.mrb[0].mxu0
    %v1552 = vadd.f32 %v1132, %v1551
    %v1553 = vpop.f32.mrb[0].mxu0
    %v1554 = vadd.f32 %v1128, %v1553
    %v1555 = vpop.f32.mrb[0].mxu0
    %v1556 = vadd.f32 %v1132, %v1555
    %1557 = vmatprep.mubr.bf16.mxu0 %v1024
    %1558 = vmatmul.mubr.bf16.gmra.mrb[0].mxu0 %v1023
    %v1559 = vpop.f32.mrb[0].mxu0
    %v1560 = vadd.f32 %v1128, %v1559
    %v1561 = vpop.f32.mrb[0].mxu0
    %v1562 = vadd.f32 %v1132, %v1561
    %v1563 = vpop.f32.mrb[0].mxu0
    %v1564 = vadd.f32 %v1128, %v1563
    %v1565 = vpop.f32.mrb[0].mxu0
    %v1566 = vadd.f32 %v1132, %v1565
    %1567 = vmatprep.mubr.bf16.mxu0 %v1030
    %1568 = vmatmul.mubr.bf16.gmra.mrb[0].mxu0 %v1029
    %v1569 = vpop.f32.mrb[0].mxu0
    %v1570 = vadd.f32 %v1128, %v1569
    %v1571 = vpop.f32.mrb[0].mxu0
    %v1572 = vadd.f32 %v1132, %v1571
    %v1573 = vpop.f32.mrb[0].mxu0
    %v1574 = vadd.f32 %v1128, %v1573
    %v1575 = vpop.f32.mrb[0].mxu0
    %v1576 = vadd.f32 %v1132, %v1575
    %1577 = vmatprep.mubr.bf16.mxu0 %v1036
    %1578 = vmatmul.mubr.bf16.gmra.mrb[0].mxu0 %v1035
    %v1579 = vpop.f32.mrb[0].mxu0
    %v1580 = vadd.f32 %v1128, %v1579
    %v1581 = vpop.f32.mrb[0].mxu0
    %v1582 = vadd.f32 %v1132, %v1581
    %v1583 = vpop.f32.mrb[0].mxu0
    %v1584 = vadd.f32 %v1128, %v1583
    %v1585 = vpop.f32.mrb[0].mxu0
    %v1586 = vadd.f32 %v1132, %v1585
    %1587 = vmatprep.mubr.bf16.mxu0 %v1042
    %1588 = vmatmul.mubr.bf16.gmra.mrb[0].mxu0 %v1041
    %v1589 = vpop.f32.mrb[0].mxu0
    %v1590 = vadd.f32 %v1128, %v1589
    %v1591 = vpop.f32.mrb[0].mxu0
    %v1592 = vadd.f32 %v1132, %v1591
    %v1593 = vpop.f32.mrb[0].mxu0
    %v1594 = vadd.f32 %v1128, %v1593
    %v1595 = vpop.f32.mrb[0].mxu0
    %v1596 = vadd.f32 %v1132, %v1595
    %1597 = vmatprep.mubr.bf16.mxu0 %v1048
    %1598 = vmatmul.mubr.bf16.gmra.mrb[0].mxu0 %v1047
    %v1599 = vpop.f32.mrb[0].mxu0
    %v1600 = vadd.f32 %v1128, %v1599
    %v1601 = vpop.f32.mrb[0].mxu0
    %v1602 = vadd.f32 %v1132, %v1601
    %v1603 = vpop.f32.mrb[0].mxu0
    %v1604 = vadd.f32 %v1128, %v1603
    %v1605 = vpop.f32.mrb[0].mxu0
    %v1606 = vadd.f32 %v1132, %v1605
    %1607 = vmatprep.mubr.bf16.mxu0 %v1054
    %1608 = vmatmul.mubr.bf16.gmra.mrb[0].mxu0 %v1053
    %v1609 = vpop.f32.mrb[0].mxu0
    %v1610 = vadd.f32 %v1128, %v1609
    %v1611 = vpop.f32.mrb[0].mxu0
    %v1612 = vadd.f32 %v1132, %v1611
    %v1613 = vpop.f32.mrb[0].mxu0
    %v1614 = vadd.f32 %v1128, %v1613
    %v1615 = vpop.f32.mrb[0].mxu0
    %v1616 = vadd.f32 %v1132, %v1615
    %1617 = vdwg.mxu0
    %1618 = vmatprep.subr.bf16.mxu0 %v1360
    %1619 = vmatpush1.bf16.msra.mxu0 %v1359
    %1620 = vmatprep.subr.bf16.mxu0 %v1362
    %1621 = vmatpush1.bf16.msra.mxu0 %v1361
    %1622 = vmatprep.subr.bf16.mxu0 %v1364
    %1623 = vmatpush1.bf16.msra.mxu0 %v1363
    %1624 = vmatprep.subr.bf16.mxu0 %v1366
    %1625 = vmatpush1.bf16.msra.mxu0 %v1365
    %1626 = vmatprep.subr.bf16.mxu0 %v1368
    %1627 = vmatpush1.bf16.msra.mxu0 %v1367
    %1628 = vmatprep.subr.bf16.mxu0 %v1370
    %1629 = vmatpush1.bf16.msra.mxu0 %v1369
    %1630 = vmatprep.subr.bf16.mxu0 %v1372
    %1631 = vmatpush1.bf16.msra.mxu0 %v1371
    %1632 = vmatprep.subr.bf16.mxu0 %v1374
    %1633 = vmatpush1.bf16.msra.mxu0 %v1373
    %1634 = vmatprep.subr.bf16.mxu0 %v1376
    %1635 = vmatpush1.bf16.msra.mxu0 %v1375
    %1636 = vmatprep.subr.bf16.mxu0 %v1378
    %1637 = vmatpush1.bf16.msra.mxu0 %v1377
    %1638 = vmatprep.subr.bf16.mxu0 %v1380
    %1639 = vmatpush1.bf16.msra.mxu0 %v1379
    %1640 = vmatprep.subr.bf16.mxu0 %v1382
    %1641 = vmatpush1.bf16.msra.mxu0 %v1381
    %1642 = vmatprep.subr.bf16.mxu0 %v1384
    %1643 = vmatpush1.bf16.msra.mxu0 %v1383
    %1644 = vmatprep.subr.bf16.mxu0 %v1386
    %1645 = vmatpush1.bf16.msra.mxu0 %v1385
    %1646 = vmatprep.subr.bf16.mxu0 %v1388
    %1647 = vmatpush1.bf16.msra.mxu0 %v1387
    %1648 = vmatprep.subr.bf16.mxu0 %v1390
    %1649 = vmatpush1.bf16.msra.mxu0 %v1389
    %1650 = vmatprep.mubr.bf16.mxu0 %v984
    %1651 = vmatmul.mubr.bf16.gmra.mrb[0].mxu0 %v983
    %v1652 = vpop.f32.mrb[0].mxu0
    %v1653 = vadd.f32 %v1490, %v1652
    %v1654 = vpop.f32.mrb[0].mxu0
    %v1655 = vadd.f32 %v1492, %v1654
    %v1656 = vpop.f32.mrb[0].mxu0
    %v1657 = vadd.f32 %v1494, %v1656
    %v1658 = vpop.f32.mrb[0].mxu0
    %v1659 = vadd.f32 %v1496, %v1658
    %1660 = vmatprep.mubr.bf16.mxu0 %v990
    %1661 = vmatmul.mubr.bf16.gmra.mrb[0].mxu0 %v989
    %v1662 = vpop.f32.mrb[0].mxu0
    %v1663 = vadd.f32 %v1500, %v1662
    %v1664 = vpop.f32.mrb[0].mxu0
    %v1665 = vadd.f32 %v1502, %v1664
    %v1666 = vpop.f32.mrb[0].mxu0
    %v1667 = vadd.f32 %v1504, %v1666
    %v1668 = vpop.f32.mrb[0].mxu0
    %v1669 = vadd.f32 %v1506, %v1668
    %1670 = vmatprep.mubr.bf16.mxu0 %v996
    %1671 = vmatmul.mubr.bf16.gmra.mrb[0].mxu0 %v995
    %v1672 = vpop.f32.mrb[0].mxu0
    %v1673 = vadd.f32 %v1510, %v1672
    %v1674 = vpop.f32.mrb[0].mxu0
    %v1675 = vadd.f32 %v1512, %v1674
    %v1676 = vpop.f32.mrb[0].mxu0
    %v1677 = vadd.f32 %v1514, %v1676
    %v1678 = vpop.f32.mrb[0].mxu0
    %v1679 = vadd.f32 %v1516, %v1678
    %1680 = vmatprep.mubr.bf16.mxu0 %v1002
    %1681 = vmatmul.mubr.bf16.gmra.mrb[0].mxu0 %v1001
    %v1682 = vpop.f32.mrb[0].mxu0
    %v1683 = vadd.f32 %v1520, %v1682
    %v1684 = vpop.f32.mrb[0].mxu0
    %v1685 = vadd.f32 %v1522, %v1684
    %v1686 = vpop.f32.mrb[0].mxu0
    %v1687 = vadd.f32 %v1524, %v1686
    %v1688 = vpop.f32.mrb[0].mxu0
    %v1689 = vadd.f32 %v1526, %v1688
    %1690 = vmatprep.mubr.bf16.mxu0 %v1008
    %1691 = vmatmul.mubr.bf16.gmra.mrb[0].mxu0 %v1007
    %v1692 = vpop.f32.mrb[0].mxu0
    %v1693 = vadd.f32 %v1530, %v1692
    %v1694 = vpop.f32.mrb[0].mxu0
    %v1695 = vadd.f32 %v1532, %v1694
    %v1696 = vpop.f32.mrb[0].mxu0
    %v1697 = vadd.f32 %v1534, %v1696
    %v1698 = vpop.f32.mrb[0].mxu0
    %v1699 = vadd.f32 %v1536, %v1698
    %1700 = vmatprep.mubr.bf16.mxu0 %v1014
    %1701 = vmatmul.mubr.bf16.gmra.mrb[0].mxu0 %v1013
    %v1702 = vpop.f32.mrb[0].mxu0
    %v1703 = vadd.f32 %v1540, %v1702
    %v1704 = vpop.f32.mrb[0].mxu0
    %v1705 = vadd.f32 %v1542, %v1704
    %v1706 = vpop.f32.mrb[0].mxu0
    %v1707 = vadd.f32 %v1544, %v1706
    %v1708 = vpop.f32.mrb[0].mxu0
    %v1709 = vadd.f32 %v1546, %v1708
    %1710 = vmatprep.mubr.bf16.mxu0 %v1020
    %1711 = vmatmul.mubr.bf16.gmra.mrb[0].mxu0 %v1019
    %v1712 = vpop.f32.mrb[0].mxu0
    %v1713 = vadd.f32 %v1550, %v1712
    %v1714 = vpop.f32.mrb[0].mxu0
    %v1715 = vadd.f32 %v1552, %v1714
    %v1716 = vpop.f32.mrb[0].mxu0
    %v1717 = vadd.f32 %v1554, %v1716
    %v1718 = vpop.f32.mrb[0].mxu0
    %v1719 = vadd.f32 %v1556, %v1718
    %1720 = vmatprep.mubr.bf16.mxu0 %v1026
    %1721 = vmatmul.mubr.bf16.gmra.mrb[0].mxu0 %v1025
    %v1722 = vpop.f32.mrb[0].mxu0
    %v1723 = vadd.f32 %v1560, %v1722
    %v1724 = vpop.f32.mrb[0].mxu0
    %v1725 = vadd.f32 %v1562, %v1724
    %v1726 = vpop.f32.mrb[0].mxu0
    %v1727 = vadd.f32 %v1564, %v1726
    %v1728 = vpop.f32.mrb[0].mxu0
    %v1729 = vadd.f32 %v1566, %v1728
    %1730 = vmatprep.mubr.bf16.mxu0 %v1032
    %1731 = vmatmul.mubr.bf16.gmra.mrb[0].mxu0 %v1031
    %v1732 = vpop.f32.mrb[0].mxu0
    %v1733 = vadd.f32 %v1570, %v1732
    %v1734 = vpop.f32.mrb[0].mxu0
    %v1735 = vadd.f32 %v1572, %v1734
    %v1736 = vpop.f32.mrb[0].mxu0
    %v1737 = vadd.f32 %v1574, %v1736
    %v1738 = vpop.f32.mrb[0].mxu0
    %v1739 = vadd.f32 %v1576, %v1738
    %1740 = vmatprep.mubr.bf16.mxu0 %v1038
    %1741 = vmatmul.mubr.bf16.gmra.mrb[0].mxu0 %v1037
    %v1742 = vpop.f32.mrb[0].mxu0
    %v1743 = vadd.f32 %v1580, %v1742
    %v1744 = vpop.f32.mrb[0].mxu0
    %v1745 = vadd.f32 %v1582, %v1744
    %v1746 = vpop.f32.mrb[0].mxu0
    %v1747 = vadd.f32 %v1584, %v1746
    %v1748 = vpop.f32.mrb[0].mxu0
    %v1749 = vadd.f32 %v1586, %v1748
    %1750 = vmatprep.mubr.bf16.mxu0 %v1044
    %1751 = vmatmul.mubr.bf16.gmra.mrb[0].mxu0 %v1043
    %v1752 = vpop.f32.mrb[0].mxu0
    %v1753 = vadd.f32 %v1590, %v1752
    %v1754 = vpop.f32.mrb[0].mxu0
    %v1755 = vadd.f32 %v1592, %v1754
    %v1756 = vpop.f32.mrb[0].mxu0
    %v1757 = vadd.f32 %v1594, %v1756
    %v1758 = vpop.f32.mrb[0].mxu0
    %v1759 = vadd.f32 %v1596, %v1758
    %1760 = vmatprep.mubr.bf16.mxu0 %v1050
    %1761 = vmatmul.mubr.bf16.gmra.mrb[0].mxu0 %v1049
    %v1762 = vpop.f32.mrb[0].mxu0
    %v1763 = vadd.f32 %v1600, %v1762
    %v1764 = vpop.f32.mrb[0].mxu0
    %v1765 = vadd.f32 %v1602, %v1764
    %v1766 = vpop.f32.mrb[0].mxu0
    %v1767 = vadd.f32 %v1604, %v1766
    %v1768 = vpop.f32.mrb[0].mxu0
    %v1769 = vadd.f32 %v1606, %v1768
    %1770 = vmatprep.mubr.bf16.mxu0 %v1056
    %1771 = vmatmul.mubr.bf16.gmra.mrb[0].mxu0 %v1055
    %v1772 = vpop.f32.mrb[0].mxu0
    %v1773 = vadd.f32 %v1610, %v1772
    %v1774 = vpop.f32.mrb[0].mxu0
    %v1775 = vadd.f32 %v1612, %v1774
    %v1776 = vpop.f32.mrb[0].mxu0
    %v1777 = vadd.f32 %v1614, %v1776
    %v1778 = vpop.f32.mrb[0].mxu0
    %v1779 = vadd.f32 %v1616, %v1778
    %1780 = vdwg.mxu0
    %v1781 = vmax.f32 %v1653, 0.0
    %v1782 = vmax.f32 %v1655, 0.0
    %v1783 = vmax.f32 %v1657, 0.0
    %v1784 = vmax.f32 %v1659, 0.0
    %v1785 = vmax.f32 %v1663, 0.0
    %v1786 = vmax.f32 %v1665, 0.0
    %v1787 = vmax.f32 %v1667, 0.0
    %v1788 = vmax.f32 %v1669, 0.0
    %v1789 = vmax.f32 %v1673, 0.0
    %v1790 = vmax.f32 %v1675, 0.0
    %v1791 = vmax.f32 %v1677, 0.0
    %v1792 = vmax.f32 %v1679, 0.0
    %v1793 = vmax.f32 %v1683, 0.0
    %v1794 = vmax.f32 %v1685, 0.0
    %v1795 = vmax.f32 %v1687, 0.0
    %v1796 = vmax.f32 %v1689, 0.0
    %v1797 = vmax.f32 %v1693, 0.0
    %v1798 = vmax.f32 %v1695, 0.0
    %v1799 = vmax.f32 %v1697, 0.0
    %v1800 = vmax.f32 %v1699, 0.0
    %v1801 = vmax.f32 %v1703, 0.0
    %v1802 = vmax.f32 %v1705, 0.0
    %v1803 = vmax.f32 %v1707, 0.0
    %v1804 = vmax.f32 %v1709, 0.0
    %v1805 = vmax.f32 %v1713, 0.0
    %v1806 = vmax.f32 %v1715, 0.0
    %v1807 = vmax.f32 %v1717, 0.0
    %v1808 = vmax.f32 %v1719, 0.0
    %v1809 = vmax.f32 %v1723, 0.0
    %v1810 = vmax.f32 %v1725, 0.0
    %v1811 = vmax.f32 %v1727, 0.0
    %v1812 = vmax.f32 %v1729, 0.0
    %v1813 = vmax.f32 %v1733, 0.0
    %v1814 = vmax.f32 %v1735, 0.0
    %v1815 = vmax.f32 %v1737, 0.0
    %v1816 = vmax.f32 %v1739, 0.0
    %v1817 = vmax.f32 %v1743, 0.0
    %v1818 = vmax.f32 %v1745, 0.0
    %v1819 = vmax.f32 %v1747, 0.0
    %v1820 = vmax.f32 %v1749, 0.0
    %v1821 = vmax.f32 %v1753, 0.0
    %v1822 = vmax.f32 %v1755, 0.0
    %v1823 = vmax.f32 %v1757, 0.0
    %v1824 = vmax.f32 %v1759, 0.0
    %v1825 = vmax.f32 %v1763, 0.0
    %v1826 = vmax.f32 %v1765, 0.0
    %v1827 = vmax.f32 %v1767, 0.0
    %v1828 = vmax.f32 %v1769, 0.0
    %v1829 = vmax.f32 %v1773, 0.0
    %v1830 = vmax.f32 %v1775, 0.0
    %v1831 = vmax.f32 %v1777, 0.0
    %v1832 = vmax.f32 %v1779, 0.0
    %v1833 = vpack.c.bf16 %v1783, %v1781
    %v1834 = vpack.c.bf16 %v1784, %v1782
    %v1835 = vpack.c.bf16 %v1787, %v1785
    %v1836 = vpack.c.bf16 %v1788, %v1786
    %v1837 = vpack.c.bf16 %v1791, %v1789
    %v1838 = vpack.c.bf16 %v1792, %v1790
    %v1839 = vpack.c.bf16 %v1795, %v1793
    %v1840 = vpack.c.bf16 %v1796, %v1794
    %v1841 = vpack.c.bf16 %v1799, %v1797
    %v1842 = vpack.c.bf16 %v1800, %v1798
    %v1843 = vpack.c.bf16 %v1803, %v1801
    %v1844 = vpack.c.bf16 %v1804, %v1802
    %v1845 = vpack.c.bf16 %v1807, %v1805
    %v1846 = vpack.c.bf16 %v1808, %v1806
    %v1847 = vpack.c.bf16 %v1811, %v1809
    %v1848 = vpack.c.bf16 %v1812, %v1810
    %v1849 = vpack.c.bf16 %v1815, %v1813
    %v1850 = vpack.c.bf16 %v1816, %v1814
    %v1851 = vpack.c.bf16 %v1819, %v1817
    %v1852 = vpack.c.bf16 %v1820, %v1818
    %v1853 = vpack.c.bf16 %v1823, %v1821
    %v1854 = vpack.c.bf16 %v1824, %v1822
    %v1855 = vpack.c.bf16 %v1827, %v1825
    %v1856 = vpack.c.bf16 %v1828, %v1826
    %v1857 = vpack.c.bf16 %v1831, %v1829
    %v1858 = vpack.c.bf16 %v1832, %v1830
    %v1859 = vld [vmem:[%s5] sm:$0xf]
    %v1860 = vld [vmem:[%s5 + $0x4] sm:$0xf]
    %v1861 = vld [vmem:[%s5 + $0x8] sm:$0xf]
    %v1862 = vld [vmem:[%s5 + $0xc] sm:$0xf]
    %v1863 = vld [vmem:[%s5 + $0x10] sm:$0xf]
    %v1864 = vld [vmem:[%s5 + $0x14] sm:$0xf]
    %v1865 = vld [vmem:[%s5 + $0x18] sm:$0xf]
    %v1866 = vld [vmem:[%s5 + $0x1c] sm:$0xf]
    %v1867 = vld [vmem:[%s5 + $0x20] sm:$0xf]
    %v1868 = vld [vmem:[%s5 + $0x24] sm:$0xf]
    %v1869 = vld [vmem:[%s5 + $0x28] sm:$0xf]
    %v1870 = vld [vmem:[%s5 + $0x2c] sm:$0xf]
    %v1871 = vld [vmem:[%s5 + $0x30] sm:$0xf]
    %v1872 = vld [vmem:[%s5 + $0x34] sm:$0xf]
    %v1873 = vld [vmem:[%s5 + $0x38] sm:$0xf]
    %v1874 = vld [vmem:[%s5 + $0x3c] sm:$0xf]
    %v1875 = vld [vmem:[%s5 + $0x40] sm:$0xf]
    %v1876 = vld [vmem:[%s5 + $0x44] sm:$0xf]
    %v1877 = vld [vmem:[%s5 + $0x48] sm:$0xf]
    %v1878 = vld [vmem:[%s5 + $0x4c] sm:$0xf]
    %v1879 = vld [vmem:[%s5 + $0x50] sm:$0xf]
    %v1880 = vld [vmem:[%s5 + $0x54] sm:$0xf]
    %v1881 = vld [vmem:[%s5 + $0x58] sm:$0xf]
    %v1882 = vld [vmem:[%s5 + $0x5c] sm:$0xf]
    %v1883 = vld [vmem:[%s5 + $0x60] sm:$0xf]
    %v1884 = vld [vmem:[%s5 + $0x64] sm:$0xf]
    %v1885 = vld [vmem:[%s5 + $0x68] sm:$0xf]
    %v1886 = vld [vmem:[%s5 + $0x6c] sm:$0xf]
    %v1887 = vld [vmem:[%s5 + $0x70] sm:$0xf]
    %v1888 = vld [vmem:[%s5 + $0x74] sm:$0xf]
    %v1889 = vld [vmem:[%s5 + $0x78] sm:$0xf]
    %v1890 = vld [vmem:[%s5 + $0x7c] sm:$0xf]
    %v1891 = vld [vmem:[%s6] sm:$0x1]
    %v1893 = vlaneseq
    %v1894 = vshrl.u32 %v1893, 7
    %v1895 = vsub.s32 0, %v1894
    %v1896 = vrot.slane %v1891, %v1895
    %v1930 = vunpack.c.l.b16 %v1859
    %v1931 = vunpack.c.l.b16 %v1860
    %v1932 = vunpack.c.l.b16 %v1861
    %v1933 = vunpack.c.l.b16 %v1862
    %v1934 = vunpack.c.l.b16 %v1863
    %v1935 = vunpack.c.l.b16 %v1864
    %v1936 = vunpack.c.l.b16 %v1865
    %v1937 = vunpack.c.l.b16 %v1866
    %v1938 = vunpack.c.l.b16 %v1867
    %v1939 = vunpack.c.l.b16 %v1868
    %v1940 = vunpack.c.l.b16 %v1869
    %v1941 = vunpack.c.l.b16 %v1870
    %v1942 = vunpack.c.l.b16 %v1871
    %v1943 = vunpack.c.l.b16 %v1872
    %v1944 = vunpack.c.l.b16 %v1873
    %v1945 = vunpack.c.l.b16 %v1874
    %v1946 = vunpack.c.l.b16 %v1875
    %v1947 = vunpack.c.l.b16 %v1876
    %v1948 = vunpack.c.l.b16 %v1877
    %v1949 = vunpack.c.l.b16 %v1878
    %v1950 = vunpack.c.l.b16 %v1879
    %v1951 = vunpack.c.l.b16 %v1880
    %v1952 = vunpack.c.l.b16 %v1881
    %v1953 = vunpack.c.l.b16 %v1882
    %v1954 = vunpack.c.l.b16 %v1883
    %v1955 = vunpack.c.l.b16 %v1884
    %v1956 = vunpack.c.l.b16 %v1885
    %v1957 = vunpack.c.l.b16 %v1886
    %v1958 = vunpack.c.l.b16 %v1887
    %v1959 = vunpack.c.l.b16 %v1888
    %v1960 = vunpack.c.l.b16 %v1889
    %v1961 = vunpack.c.l.b16 %v1890
    %v1962 = vpack.c.b16 %v1931, %v1930
    %v1963 = vpack.c.b16 %v1933, %v1932
    %v1964 = vpack.c.b16 %v1935, %v1934
    %v1965 = vpack.c.b16 %v1937, %v1936
    %v1966 = vpack.c.b16 %v1939, %v1938
    %v1967 = vpack.c.b16 %v1941, %v1940
    %v1968 = vpack.c.b16 %v1943, %v1942
    %v1969 = vpack.c.b16 %v1945, %v1944
    %v1970 = vpack.c.b16 %v1947, %v1946
    %v1971 = vpack.c.b16 %v1949, %v1948
    %v1972 = vpack.c.b16 %v1951, %v1950
    %v1973 = vpack.c.b16 %v1953, %v1952
    %v1974 = vpack.c.b16 %v1955, %v1954
    %v1975 = vpack.c.b16 %v1957, %v1956
    %v1976 = vpack.c.b16 %v1959, %v1958
    %v1977 = vpack.c.b16 %v1961, %v1960
    %1994 = vmatprep.subr.bf16.mxu0 0
    %1995 = vmatpush1.bf16.msra.mxu0 %v1962
    %1996 = vmatprep.subr.bf16.mxu0 0
    %1997 = vmatpush1.bf16.msra.mxu0 %v1963
    %1998 = vmatprep.subr.bf16.mxu0 0
    %1999 = vmatpush1.bf16.msra.mxu0 %v1964
    %2000 = vmatprep.subr.bf16.mxu0 0
    %2001 = vmatpush1.bf16.msra.mxu0 %v1965
    %2002 = vmatprep.subr.bf16.mxu0 0
    %2003 = vmatpush1.bf16.msra.mxu0 %v1966
    %2004 = vmatprep.subr.bf16.mxu0 0
    %2005 = vmatpush1.bf16.msra.mxu0 %v1967
    %2006 = vmatprep.subr.bf16.mxu0 0
    %2007 = vmatpush1.bf16.msra.mxu0 %v1968
    %2008 = vmatprep.subr.bf16.mxu0 0
    %2009 = vmatpush1.bf16.msra.mxu0 %v1969
    %2010 = vmatprep.subr.bf16.mxu0 0
    %2011 = vmatpush1.bf16.msra.mxu0 %v1970
    %2012 = vmatprep.subr.bf16.mxu0 0
    %2013 = vmatpush1.bf16.msra.mxu0 %v1971
    %2014 = vmatprep.subr.bf16.mxu0 0
    %2015 = vmatpush1.bf16.msra.mxu0 %v1972
    %2016 = vmatprep.subr.bf16.mxu0 0
    %2017 = vmatpush1.bf16.msra.mxu0 %v1973
    %2018 = vmatprep.subr.bf16.mxu0 0
    %2019 = vmatpush1.bf16.msra.mxu0 %v1974
    %2020 = vmatprep.subr.bf16.mxu0 0
    %2021 = vmatpush1.bf16.msra.mxu0 %v1975
    %2022 = vmatprep.subr.bf16.mxu0 0
    %2023 = vmatpush1.bf16.msra.mxu0 %v1976
    %2024 = vmatprep.subr.bf16.mxu0 0
    %2025 = vmatpush1.bf16.msra.mxu0 %v1977
    %2026 = vmatprep.mubr.bf16.mxu0 %v1834
    %2027 = vmatmul.mubr.bf16.gmra.mrb[0].mxu0 %v1833
    %v2028 = vpop.f32.mrb[0].mxu0
    %v2029 = vadd.f32 %v1896, %v2028
    %v2030 = vpop.f32.mrb[0].mxu0
    %v2031 = vpop.f32.mrb[0].mxu0
    %v2032 = vadd.f32 %v1896, %v2031
    %v2033 = vpop.f32.mrb[0].mxu0
    %2034 = vmatprep.mubr.bf16.mxu0 %v1836
    %2035 = vmatmul.mubr.bf16.gmra.mrb[0].mxu0 %v1835
    %v2036 = vpop.f32.mrb[0].mxu0
    %v2037 = vadd.f32 %v1896, %v2036
    %v2038 = vpop.f32.mrb[0].mxu0
    %v2039 = vpop.f32.mrb[0].mxu0
    %v2040 = vadd.f32 %v1896, %v2039
    %v2041 = vpop.f32.mrb[0].mxu0
    %2042 = vmatprep.mubr.bf16.mxu0 %v1838
    %2043 = vmatmul.mubr.bf16.gmra.mrb[0].mxu0 %v1837
    %v2044 = vpop.f32.mrb[0].mxu0
    %v2045 = vadd.f32 %v1896, %v2044
    %v2046 = vpop.f32.mrb[0].mxu0
    %v2047 = vpop.f32.mrb[0].mxu0
    %v2048 = vadd.f32 %v1896, %v2047
    %v2049 = vpop.f32.mrb[0].mxu0
    %2050 = vmatprep.mubr.bf16.mxu0 %v1840
    %2051 = vmatmul.mubr.bf16.gmra.mrb[0].mxu0 %v1839
    %v2052 = vpop.f32.mrb[0].mxu0
    %v2053 = vadd.f32 %v1896, %v2052
    %v2054 = vpop.f32.mrb[0].mxu0
    %v2055 = vpop.f32.mrb[0].mxu0
    %v2056 = vadd.f32 %v1896, %v2055
    %v2057 = vpop.f32.mrb[0].mxu0
    %2058 = vmatprep.mubr.bf16.mxu0 %v1842
    %2059 = vmatmul.mubr.bf16.gmra.mrb[0].mxu0 %v1841
    %v2060 = vpop.f32.mrb[0].mxu0
    %v2061 = vadd.f32 %v1896, %v2060
    %v2062 = vpop.f32.mrb[0].mxu0
    %v2063 = vpop.f32.mrb[0].mxu0
    %v2064 = vadd.f32 %v1896, %v2063
    %v2065 = vpop.f32.mrb[0].mxu0
    %2066 = vmatprep.mubr.bf16.mxu0 %v1844
    %2067 = vmatmul.mubr.bf16.gmra.mrb[0].mxu0 %v1843
    %v2068 = vpop.f32.mrb[0].mxu0
    %v2069 = vadd.f32 %v1896, %v2068
    %v2070 = vpop.f32.mrb[0].mxu0
    %v2071 = vpop.f32.mrb[0].mxu0
    %v2072 = vadd.f32 %v1896, %v2071
    %v2073 = vpop.f32.mrb[0].mxu0
    %2074 = vmatprep.mubr.bf16.mxu0 %v1846
    %2075 = vmatmul.mubr.bf16.gmra.mrb[0].mxu0 %v1845
    %v2076 = vpop.f32.mrb[0].mxu0
    %v2077 = vadd.f32 %v1896, %v2076
    %v2078 = vpop.f32.mrb[0].mxu0
    %v2079 = vpop.f32.mrb[0].mxu0
    %v2080 = vadd.f32 %v1896, %v2079
    %v2081 = vpop.f32.mrb[0].mxu0
    %2082 = vmatprep.mubr.bf16.mxu0 %v1848
    %2083 = vmatmul.mubr.bf16.gmra.mrb[0].mxu0 %v1847
    %v2084 = vpop.f32.mrb[0].mxu0
    %v2085 = vadd.f32 %v1896, %v2084
    %v2086 = vpop.f32.mrb[0].mxu0
    %v2087 = vpop.f32.mrb[0].mxu0
    %v2088 = vadd.f32 %v1896, %v2087
    %v2089 = vpop.f32.mrb[0].mxu0
    %2090 = vmatprep.mubr.bf16.mxu0 %v1850
    %2091 = vmatmul.mubr.bf16.gmra.mrb[0].mxu0 %v1849
    %v2092 = vpop.f32.mrb[0].mxu0
    %v2093 = vadd.f32 %v1896, %v2092
    %v2094 = vpop.f32.mrb[0].mxu0
    %v2095 = vpop.f32.mrb[0].mxu0
    %v2096 = vadd.f32 %v1896, %v2095
    %v2097 = vpop.f32.mrb[0].mxu0
    %2098 = vmatprep.mubr.bf16.mxu0 %v1852
    %2099 = vmatmul.mubr.bf16.gmra.mrb[0].mxu0 %v1851
    %v2100 = vpop.f32.mrb[0].mxu0
    %v2101 = vadd.f32 %v1896, %v2100
    %v2102 = vpop.f32.mrb[0].mxu0
    %v2103 = vpop.f32.mrb[0].mxu0
    %v2104 = vadd.f32 %v1896, %v2103
    %v2105 = vpop.f32.mrb[0].mxu0
    %2106 = vmatprep.mubr.bf16.mxu0 %v1854
    %2107 = vmatmul.mubr.bf16.gmra.mrb[0].mxu0 %v1853
    %v2108 = vpop.f32.mrb[0].mxu0
    %v2109 = vadd.f32 %v1896, %v2108
    %v2110 = vpop.f32.mrb[0].mxu0
    %v2111 = vpop.f32.mrb[0].mxu0
    %v2112 = vadd.f32 %v1896, %v2111
    %v2113 = vpop.f32.mrb[0].mxu0
    %2114 = vmatprep.mubr.bf16.mxu0 %v1856
    %2115 = vmatmul.mubr.bf16.gmra.mrb[0].mxu0 %v1855
    %v2116 = vpop.f32.mrb[0].mxu0
    %v2117 = vadd.f32 %v1896, %v2116
    %v2118 = vpop.f32.mrb[0].mxu0
    %v2119 = vpop.f32.mrb[0].mxu0
    %v2120 = vadd.f32 %v1896, %v2119
    %v2121 = vpop.f32.mrb[0].mxu0
    %2122 = vmatprep.mubr.bf16.mxu0 %v1858
    %2123 = vmatmul.mubr.bf16.gmra.mrb[0].mxu0 %v1857
    %v2124 = vpop.f32.mrb[0].mxu0
    %v2125 = vadd.f32 %v1896, %v2124
    %v2126 = vpop.f32.mrb[0].mxu0
    %v2127 = vpop.f32.mrb[0].mxu0
    %v2128 = vadd.f32 %v1896, %v2127
    %v2129 = vpop.f32.mrb[0].mxu0
    %2130 = vdwg.mxu0
    %v2131 = vmax.f32 %v2029, 0.0
    %v2132 = vmax.f32 %v2032, 0.0
    %v2133 = vmax.f32 %v2037, 0.0
    %v2134 = vmax.f32 %v2040, 0.0
    %v2135 = vmax.f32 %v2045, 0.0
    %v2136 = vmax.f32 %v2048, 0.0
    %v2137 = vmax.f32 %v2053, 0.0
    %v2138 = vmax.f32 %v2056, 0.0
    %v2139 = vmax.f32 %v2061, 0.0
    %v2140 = vmax.f32 %v2064, 0.0
    %v2141 = vmax.f32 %v2069, 0.0
    %v2142 = vmax.f32 %v2072, 0.0
    %v2143 = vmax.f32 %v2077, 0.0
    %v2144 = vmax.f32 %v2080, 0.0
    %v2145 = vmax.f32 %v2085, 0.0
    %v2146 = vmax.f32 %v2088, 0.0
    %v2147 = vmax.f32 %v2093, 0.0
    %v2148 = vmax.f32 %v2096, 0.0
    %v2149 = vmax.f32 %v2101, 0.0
    %v2150 = vmax.f32 %v2104, 0.0
    %v2151 = vmax.f32 %v2109, 0.0
    %v2152 = vmax.f32 %v2112, 0.0
    %v2153 = vmax.f32 %v2117, 0.0
    %v2154 = vmax.f32 %v2120, 0.0
    %v2155 = vmax.f32 %v2125, 0.0
    %v2156 = vmax.f32 %v2128, 0.0
    %v2157 = vpack.c.bf16 %v2132, %v2131
    %v2158 = vpack.c.bf16 %v2134, %v2133
    %v2159 = vpack.c.bf16 %v2136, %v2135
    %v2160 = vpack.c.bf16 %v2138, %v2137
    %v2161 = vpack.c.bf16 %v2140, %v2139
    %v2162 = vpack.c.bf16 %v2142, %v2141
    %v2163 = vpack.c.bf16 %v2144, %v2143
    %v2164 = vpack.c.bf16 %v2146, %v2145
    %v2165 = vpack.c.bf16 %v2148, %v2147
    %v2166 = vpack.c.bf16 %v2150, %v2149
    %v2167 = vpack.c.bf16 %v2152, %v2151
    %v2168 = vpack.c.bf16 %v2154, %v2153
    %v2169 = vpack.c.bf16 %v2156, %v2155
    %2170 = vst [vmem:[#allocation2] sm:$0xff] %v2157
    %2171 = vst [vmem:[#allocation2 + $0x10] sm:$0xff] %v2158
    %2172 = vst [vmem:[#allocation2 + $0x20] sm:$0xff] %v2159
    %2173 = vst [vmem:[#allocation2 + $0x30] sm:$0xff] %v2160
    %2174 = vst [vmem:[#allocation2 + $0x40] sm:$0xff] %v2161
    %2175 = vst [vmem:[#allocation2 + $0x50] sm:$0xff] %v2162
    %2176 = vst [vmem:[#allocation2 + $0x60] sm:$0xff] %v2163
    %2177 = vst [vmem:[#allocation2 + $0x70] sm:$0xff] %v2164
    %2178 = vst [vmem:[#allocation2 + $0x80] sm:$0xff] %v2165
    %2179 = vst [vmem:[#allocation2 + $0x90] sm:$0xff] %v2166
    %2180 = vst [vmem:[#allocation2 + $0xa0] sm:$0xff] %v2167
    %2181 = vst [vmem:[#allocation2 + $0xb0] sm:$0xff] %v2168
    %2182 = vst [vmem:[#allocation2 + $0xc0] sm:$0xff] %v2169
    %v2183 = vld [vmem:[#allocation6] sm:$0xf]
    %v2184 = vld [vmem:[#allocation6 + $0x4] sm:$0xf]
    %v2185 = vld [vmem:[#allocation6 + $0x8] sm:$0xf]
    %v2186 = vld [vmem:[#allocation6 + $0xc] sm:$0xf]
    %v2187 = vld [vmem:[#allocation6 + $0x10] sm:$0xf]
    %v2188 = vld [vmem:[#allocation6 + $0x14] sm:$0xf]
    %v2189 = vld [vmem:[#allocation6 + $0x18] sm:$0xf]
    %v2190 = vld [vmem:[#allocation6 + $0x1c] sm:$0xf]
    %v2191 = vld [vmem:[#allocation6 + $0x20] sm:$0xf]
    %v2192 = vld [vmem:[#allocation6 + $0x24] sm:$0xf]
    %v2193 = vld [vmem:[#allocation6 + $0x28] sm:$0xf]
    %v2194 = vld [vmem:[#allocation6 + $0x2c] sm:$0xf]
    %v2195 = vld [vmem:[#allocation6 + $0x30] sm:$0xf]
    %v2196 = vld [vmem:[#allocation6 + $0x34] sm:$0xf]
    %v2197 = vld [vmem:[#allocation6 + $0x38] sm:$0xf]
    %v2198 = vld [vmem:[#allocation6 + $0x3c] sm:$0xf]
    %v2199 = vld [vmem:[#allocation6 + $0x40] sm:$0xf]
    %v2200 = vld [vmem:[#allocation6 + $0x44] sm:$0xf]
    %v2201 = vld [vmem:[#allocation6 + $0x48] sm:$0xf]
    %v2202 = vld [vmem:[#allocation6 + $0x4c] sm:$0xf]
    %v2203 = vld [vmem:[#allocation6 + $0x50] sm:$0xf]
    %v2204 = vld [vmem:[#allocation6 + $0x54] sm:$0xf]
    %v2205 = vld [vmem:[#allocation6 + $0x58] sm:$0xf]
    %v2206 = vld [vmem:[#allocation6 + $0x5c] sm:$0xf]
    %v2207 = vld [vmem:[#allocation6 + $0x60] sm:$0xf]
    %v2208 = vld [vmem:[#allocation6 + $0x64] sm:$0xf]
    %v2209 = vld [vmem:[#allocation6 + $0x68] sm:$0xf]
    %v2210 = vld [vmem:[#allocation6 + $0x6c] sm:$0xf]
    %v2211 = vld [vmem:[#allocation6 + $0x70] sm:$0xf]
    %v2212 = vld [vmem:[#allocation6 + $0x74] sm:$0xf]
    %v2213 = vld [vmem:[#allocation6 + $0x78] sm:$0xf]
    %v2214 = vld [vmem:[#allocation6 + $0x7c] sm:$0xf]
    %v2215 = vld [vmem:[%s8] sm:$0x1]
    %v2217 = vlaneseq
    %v2218 = vshrl.u32 %v2217, 7
    %v2219 = vsub.s32 0, %v2218
    %v2220 = vrot.slane %v2215, %v2219
    %v2254 = vunpack.c.l.b16 %v2183
    %v2255 = vunpack.c.l.b16 %v2184
    %v2256 = vunpack.c.l.b16 %v2185
    %v2257 = vunpack.c.l.b16 %v2186
    %v2258 = vunpack.c.l.b16 %v2187
    %v2259 = vunpack.c.l.b16 %v2188
    %v2260 = vunpack.c.l.b16 %v2189
    %v2261 = vunpack.c.l.b16 %v2190
    %v2262 = vunpack.c.l.b16 %v2191
    %v2263 = vunpack.c.l.b16 %v2192
    %v2264 = vunpack.c.l.b16 %v2193
    %v2265 = vunpack.c.l.b16 %v2194
    %v2266 = vunpack.c.l.b16 %v2195
    %v2267 = vunpack.c.l.b16 %v2196
    %v2268 = vunpack.c.l.b16 %v2197
    %v2269 = vunpack.c.l.b16 %v2198
    %v2270 = vunpack.c.l.b16 %v2199
    %v2271 = vunpack.c.l.b16 %v2200
    %v2272 = vunpack.c.l.b16 %v2201
    %v2273 = vunpack.c.l.b16 %v2202
    %v2274 = vunpack.c.l.b16 %v2203
    %v2275 = vunpack.c.l.b16 %v2204
    %v2276 = vunpack.c.l.b16 %v2205
    %v2277 = vunpack.c.l.b16 %v2206
    %v2278 = vunpack.c.l.b16 %v2207
    %v2279 = vunpack.c.l.b16 %v2208
    %v2280 = vunpack.c.l.b16 %v2209
    %v2281 = vunpack.c.l.b16 %v2210
    %v2282 = vunpack.c.l.b16 %v2211
    %v2283 = vunpack.c.l.b16 %v2212
    %v2284 = vunpack.c.l.b16 %v2213
    %v2285 = vunpack.c.l.b16 %v2214
    %v2286 = vpack.c.b16 %v2255, %v2254
    %v2287 = vpack.c.b16 %v2257, %v2256
    %v2288 = vpack.c.b16 %v2259, %v2258
    %v2289 = vpack.c.b16 %v2261, %v2260
    %v2290 = vpack.c.b16 %v2263, %v2262
    %v2291 = vpack.c.b16 %v2265, %v2264
    %v2292 = vpack.c.b16 %v2267, %v2266
    %v2293 = vpack.c.b16 %v2269, %v2268
    %v2294 = vpack.c.b16 %v2271, %v2270
    %v2295 = vpack.c.b16 %v2273, %v2272
    %v2296 = vpack.c.b16 %v2275, %v2274
    %v2297 = vpack.c.b16 %v2277, %v2276
    %v2298 = vpack.c.b16 %v2279, %v2278
    %v2299 = vpack.c.b16 %v2281, %v2280
    %v2300 = vpack.c.b16 %v2283, %v2282
    %v2301 = vpack.c.b16 %v2285, %v2284
    %2318 = vmatprep.subr.bf16.mxu0 0
    %2319 = vmatpush1.bf16.msra.mxu0 %v2286
    %2320 = vmatprep.subr.bf16.mxu0 0
    %2321 = vmatpush1.bf16.msra.mxu0 %v2287
    %2322 = vmatprep.subr.bf16.mxu0 0
    %2323 = vmatpush1.bf16.msra.mxu0 %v2288
    %2324 = vmatprep.subr.bf16.mxu0 0
    %2325 = vmatpush1.bf16.msra.mxu0 %v2289
    %2326 = vmatprep.subr.bf16.mxu0 0
    %2327 = vmatpush1.bf16.msra.mxu0 %v2290
    %2328 = vmatprep.subr.bf16.mxu0 0
    %2329 = vmatpush1.bf16.msra.mxu0 %v2291
    %2330 = vmatprep.subr.bf16.mxu0 0
    %2331 = vmatpush1.bf16.msra.mxu0 %v2292
    %2332 = vmatprep.subr.bf16.mxu0 0
    %2333 = vmatpush1.bf16.msra.mxu0 %v2293
    %2334 = vmatprep.subr.bf16.mxu0 0
    %2335 = vmatpush1.bf16.msra.mxu0 %v2294
    %2336 = vmatprep.subr.bf16.mxu0 0
    %2337 = vmatpush1.bf16.msra.mxu0 %v2295
    %2338 = vmatprep.subr.bf16.mxu0 0
    %2339 = vmatpush1.bf16.msra.mxu0 %v2296
    %2340 = vmatprep.subr.bf16.mxu0 0
    %2341 = vmatpush1.bf16.msra.mxu0 %v2297
    %2342 = vmatprep.subr.bf16.mxu0 0
    %2343 = vmatpush1.bf16.msra.mxu0 %v2298
    %2344 = vmatprep.subr.bf16.mxu0 0
    %2345 = vmatpush1.bf16.msra.mxu0 %v2299
    %2346 = vmatprep.subr.bf16.mxu0 0
    %2347 = vmatpush1.bf16.msra.mxu0 %v2300
    %2348 = vmatprep.subr.bf16.mxu0 0
    %2349 = vmatpush1.bf16.msra.mxu0 %v2301
    %2350 = vmatprep.mubr.bf16.mxu0 %v986
    %2351 = vmatmul.mubr.bf16.gmra.mrb[0].mxu0 %v985
    %v2352 = vpop.f32.mrb[0].mxu0
    %v2353 = vadd.f32 %v2220, %v2352
    %v2354 = vpop.f32.mrb[0].mxu0
    %v2355 = vpop.f32.mrb[0].mxu0
    %v2356 = vadd.f32 %v2220, %v2355
    %v2357 = vpop.f32.mrb[0].mxu0
    %2358 = vmatprep.mubr.bf16.mxu0 %v992
    %2359 = vmatmul.mubr.bf16.gmra.mrb[0].mxu0 %v991
    %v2360 = vpop.f32.mrb[0].mxu0
    %v2361 = vadd.f32 %v2220, %v2360
    %v2362 = vpop.f32.mrb[0].mxu0
    %v2363 = vpop.f32.mrb[0].mxu0
    %v2364 = vadd.f32 %v2220, %v2363
    %v2365 = vpop.f32.mrb[0].mxu0
    %2366 = vmatprep.mubr.bf16.mxu0 %v998
    %2367 = vmatmul.mubr.bf16.gmra.mrb[0].mxu0 %v997
    %v2368 = vpop.f32.mrb[0].mxu0
    %v2369 = vadd.f32 %v2220, %v2368
    %v2370 = vpop.f32.mrb[0].mxu0
    %v2371 = vpop.f32.mrb[0].mxu0
    %v2372 = vadd.f32 %v2220, %v2371
    %v2373 = vpop.f32.mrb[0].mxu0
    %2374 = vmatprep.mubr.bf16.mxu0 %v1004
    %2375 = vmatmul.mubr.bf16.gmra.mrb[0].mxu0 %v1003
    %v2376 = vpop.f32.mrb[0].mxu0
    %v2377 = vadd.f32 %v2220, %v2376
    %v2378 = vpop.f32.mrb[0].mxu0
    %v2379 = vpop.f32.mrb[0].mxu0
    %v2380 = vadd.f32 %v2220, %v2379
    %v2381 = vpop.f32.mrb[0].mxu0
    %2382 = vmatprep.mubr.bf16.mxu0 %v1010
    %2383 = vmatmul.mubr.bf16.gmra.mrb[0].mxu0 %v1009
    %v2384 = vpop.f32.mrb[0].mxu0
    %v2385 = vadd.f32 %v2220, %v2384
    %v2386 = vpop.f32.mrb[0].mxu0
    %v2387 = vpop.f32.mrb[0].mxu0
    %v2388 = vadd.f32 %v2220, %v2387
    %v2389 = vpop.f32.mrb[0].mxu0
    %2390 = vmatprep.mubr.bf16.mxu0 %v1016
    %2391 = vmatmul.mubr.bf16.gmra.mrb[0].mxu0 %v1015
    %v2392 = vpop.f32.mrb[0].mxu0
    %v2393 = vadd.f32 %v2220, %v2392
    %v2394 = vpop.f32.mrb[0].mxu0
    %v2395 = vpop.f32.mrb[0].mxu0
    %v2396 = vadd.f32 %v2220, %v2395
    %v2397 = vpop.f32.mrb[0].mxu0
    %2398 = vmatprep.mubr.bf16.mxu0 %v1022
    %2399 = vmatmul.mubr.bf16.gmra.mrb[0].mxu0 %v1021
    %v2400 = vpop.f32.mrb[0].mxu0
    %v2401 = vadd.f32 %v2220, %v2400
    %v2402 = vpop.f32.mrb[0].mxu0
    %v2403 = vpop.f32.mrb[0].mxu0
    %v2404 = vadd.f32 %v2220, %v2403
    %v2405 = vpop.f32.mrb[0].mxu0
    %2406 = vmatprep.mubr.bf16.mxu0 %v1028
    %2407 = vmatmul.mubr.bf16.gmra.mrb[0].mxu0 %v1027
    %v2408 = vpop.f32.mrb[0].mxu0
    %v2409 = vadd.f32 %v2220, %v2408
    %v2410 = vpop.f32.mrb[0].mxu0
    %v2411 = vpop.f32.mrb[0].mxu0
    %v2412 = vadd.f32 %v2220, %v2411
    %v2413 = vpop.f32.mrb[0].mxu0
    %2414 = vmatprep.mubr.bf16.mxu0 %v1034
    %2415 = vmatmul.mubr.bf16.gmra.mrb[0].mxu0 %v1033
    %v2416 = vpop.f32.mrb[0].mxu0
    %v2417 = vadd.f32 %v2220, %v2416
    %v2418 = vpop.f32.mrb[0].mxu0
    %v2419 = vpop.f32.mrb[0].mxu0
    %v2420 = vadd.f32 %v2220, %v2419
    %v2421 = vpop.f32.mrb[0].mxu0
    %2422 = vmatprep.mubr.bf16.mxu0 %v1040
    %2423 = vmatmul.mubr.bf16.gmra.mrb[0].mxu0 %v1039
    %v2424 = vpop.f32.mrb[0].mxu0
    %v2425 = vadd.f32 %v2220, %v2424
    %v2426 = vpop.f32.mrb[0].mxu0
    %v2427 = vpop.f32.mrb[0].mxu0
    %v2428 = vadd.f32 %v2220, %v2427
    %v2429 = vpop.f32.mrb[0].mxu0
    %2430 = vmatprep.mubr.bf16.mxu0 %v1046
    %2431 = vmatmul.mubr.bf16.gmra.mrb[0].mxu0 %v1045
    %v2432 = vpop.f32.mrb[0].mxu0
    %v2433 = vadd.f32 %v2220, %v2432
    %v2434 = vpop.f32.mrb[0].mxu0
    %v2435 = vpop.f32.mrb[0].mxu0
    %v2436 = vadd.f32 %v2220, %v2435
    %v2437 = vpop.f32.mrb[0].mxu0
    %2438 = vmatprep.mubr.bf16.mxu0 %v1052
    %2439 = vmatmul.mubr.bf16.gmra.mrb[0].mxu0 %v1051
    %v2440 = vpop.f32.mrb[0].mxu0
    %v2441 = vadd.f32 %v2220, %v2440
    %v2442 = vpop.f32.mrb[0].mxu0
    %v2443 = vpop.f32.mrb[0].mxu0
    %v2444 = vadd.f32 %v2220, %v2443
    %v2445 = vpop.f32.mrb[0].mxu0
    %2446 = vmatprep.mubr.bf16.mxu0 %v1058
    %2447 = vmatmul.mubr.bf16.gmra.mrb[0].mxu0 %v1057
    %v2448 = vpop.f32.mrb[0].mxu0
    %v2449 = vadd.f32 %v2220, %v2448
    %v2450 = vpop.f32.mrb[0].mxu0
    %v2451 = vpop.f32.mrb[0].mxu0
    %v2452 = vadd.f32 %v2220, %v2451
    %v2453 = vpop.f32.mrb[0].mxu0
    %2454 = vdwg.mxu0
    %v2455 = vmax.f32 %v2353, 0.0
    %v2456 = vmax.f32 %v2356, 0.0
    %v2457 = vmax.f32 %v2361, 0.0
    %v2458 = vmax.f32 %v2364, 0.0
    %v2459 = vmax.f32 %v2369, 0.0
    %v2460 = vmax.f32 %v2372, 0.0
    %v2461 = vmax.f32 %v2377, 0.0
    %v2462 = vmax.f32 %v2380, 0.0
    %v2463 = vmax.f32 %v2385, 0.0
    %v2464 = vmax.f32 %v2388, 0.0
    %v2465 = vmax.f32 %v2393, 0.0
    %v2466 = vmax.f32 %v2396, 0.0
    %v2467 = vmax.f32 %v2401, 0.0
    %v2468 = vmax.f32 %v2404, 0.0
    %v2469 = vmax.f32 %v2409, 0.0
    %v2470 = vmax.f32 %v2412, 0.0
    %v2471 = vmax.f32 %v2417, 0.0
    %v2472 = vmax.f32 %v2420, 0.0
    %v2473 = vmax.f32 %v2425, 0.0
    %v2474 = vmax.f32 %v2428, 0.0
    %v2475 = vmax.f32 %v2433, 0.0
    %v2476 = vmax.f32 %v2436, 0.0
    %v2477 = vmax.f32 %v2441, 0.0
    %v2478 = vmax.f32 %v2444, 0.0
    %v2479 = vmax.f32 %v2449, 0.0
    %v2480 = vmax.f32 %v2452, 0.0
    %v2481 = vpack.c.bf16 %v2456, %v2455
    %v2482 = vpack.c.bf16 %v2458, %v2457
    %v2483 = vpack.c.bf16 %v2460, %v2459
    %v2484 = vpack.c.bf16 %v2462, %v2461
    %v2485 = vpack.c.bf16 %v2464, %v2463
    %v2486 = vpack.c.bf16 %v2466, %v2465
    %v2487 = vpack.c.bf16 %v2468, %v2467
    %v2488 = vpack.c.bf16 %v2470, %v2469
    %v2489 = vpack.c.bf16 %v2472, %v2471
    %v2490 = vpack.c.bf16 %v2474, %v2473
    %v2491 = vpack.c.bf16 %v2476, %v2475
    %v2492 = vpack.c.bf16 %v2478, %v2477
    %v2493 = vpack.c.bf16 %v2480, %v2479
    %2494 = vst [vmem:[#allocation2 + $0x8] sm:$0xff] %v2481
    %2495 = vst [vmem:[#allocation2 + $0x18] sm:$0xff] %v2482
    %2496 = vst [vmem:[#allocation2 + $0x28] sm:$0xff] %v2483
    %2497 = vst [vmem:[#allocation2 + $0x38] sm:$0xff] %v2484
    %2498 = vst [vmem:[#allocation2 + $0x48] sm:$0xff] %v2485
    %2499 = vst [vmem:[#allocation2 + $0x58] sm:$0xff] %v2486
    %2500 = vst [vmem:[#allocation2 + $0x68] sm:$0xff] %v2487
    %2501 = vst [vmem:[#allocation2 + $0x78] sm:$0xff] %v2488
    %2502 = vst [vmem:[#allocation2 + $0x88] sm:$0xff] %v2489
    %2503 = vst [vmem:[#allocation2 + $0x98] sm:$0xff] %v2490
    %2504 = vst [vmem:[#allocation2 + $0xa8] sm:$0xff] %v2491
    %2505 = vst [vmem:[#allocation2 + $0xb8] sm:$0xff] %v2492
    %2506 = vst [vmem:[#allocation2 + $0xc8] sm:$0xff] %v2493
    %v2507 = vld [vmem:[#allocation2] sm:$0xff]
    %v2508 = vld [vmem:[#allocation2 + $0x8] sm:$0xff]
    %v2509 = vld [vmem:[#allocation2 + $0x10] sm:$0xff]
    %v2510 = vld [vmem:[#allocation2 + $0x18] sm:$0xff]
    %v2511 = vld [vmem:[#allocation2 + $0x20] sm:$0xff]
    %v2512 = vld [vmem:[#allocation2 + $0x28] sm:$0xff]
    %v2513 = vld [vmem:[#allocation2 + $0x30] sm:$0xff]
    %v2514 = vld [vmem:[#allocation2 + $0x38] sm:$0xff]
    %v2515 = vld [vmem:[#allocation2 + $0x40] sm:$0xff]
    %v2516 = vld [vmem:[#allocation2 + $0x48] sm:$0xff]
    %v2517 = vld [vmem:[#allocation2 + $0x50] sm:$0xff]
    %v2518 = vld [vmem:[#allocation2 + $0x58] sm:$0xff]
    %v2519 = vld [vmem:[#allocation2 + $0x60] sm:$0xff]
    %v2520 = vld [vmem:[#allocation2 + $0x68] sm:$0xff]
    %v2521 = vld [vmem:[#allocation2 + $0x70] sm:$0xff]
    %v2522 = vld [vmem:[#allocation2 + $0x78] sm:$0xff]
    %v2523 = vld [vmem:[#allocation2 + $0x80] sm:$0xff]
    %v2524 = vld [vmem:[#allocation2 + $0x88] sm:$0xff]
    %v2525 = vld [vmem:[#allocation2 + $0x90] sm:$0xff]
    %v2526 = vld [vmem:[#allocation2 + $0x98] sm:$0xff]
    %v2527 = vld [vmem:[#allocation2 + $0xa0] sm:$0xff]
    %v2528 = vld [vmem:[#allocation2 + $0xa8] sm:$0xff]
    %v2529 = vld [vmem:[#allocation2 + $0xb0] sm:$0xff]
    %v2530 = vld [vmem:[#allocation2 + $0xb8] sm:$0xff]
    %v2531 = vld [vmem:[#allocation2 + $0xc0] sm:$0xff]
    %v2532 = vld [vmem:[#allocation2 + $0xc8] sm:$0xff]
    %v2533 = vld [vmem:[#allocation8] sm:$0xf]
    %v2534 = vld [vmem:[#allocation8 + $0x4] sm:$0xf]
    %v2535 = vld [vmem:[#allocation8 + $0x8] sm:$0xf]
    %v2536 = vld [vmem:[#allocation8 + $0xc] sm:$0xf]
    %v2537 = vld [vmem:[#allocation8 + $0x10] sm:$0xf]
    %v2538 = vld [vmem:[#allocation8 + $0x14] sm:$0xf]
    %v2539 = vld [vmem:[#allocation8 + $0x18] sm:$0xf]
    %v2540 = vld [vmem:[#allocation8 + $0x1c] sm:$0xf]
    %v2541 = vld [vmem:[#allocation8 + $0x20] sm:$0xf]
    %v2542 = vld [vmem:[#allocation8 + $0x24] sm:$0xf]
    %v2543 = vld [vmem:[#allocation8 + $0x28] sm:$0xf]
    %v2544 = vld [vmem:[#allocation8 + $0x2c] sm:$0xf]
    %v2545 = vld [vmem:[#allocation8 + $0x30] sm:$0xf]
    %v2546 = vld [vmem:[#allocation8 + $0x34] sm:$0xf]
    %v2547 = vld [vmem:[#allocation8 + $0x38] sm:$0xf]
    %v2548 = vld [vmem:[#allocation8 + $0x3c] sm:$0xf]
    %v2549 = vld [vmem:[#allocation8 + $0x40] sm:$0xf]
    %v2550 = vld [vmem:[#allocation8 + $0x44] sm:$0xf]
    %v2551 = vld [vmem:[#allocation8 + $0x48] sm:$0xf]
    %v2552 = vld [vmem:[#allocation8 + $0x4c] sm:$0xf]
    %v2553 = vld [vmem:[#allocation8 + $0x50] sm:$0xf]
    %v2554 = vld [vmem:[#allocation8 + $0x54] sm:$0xf]
    %v2555 = vld [vmem:[#allocation8 + $0x58] sm:$0xf]
    %v2556 = vld [vmem:[#allocation8 + $0x5c] sm:$0xf]
    %v2557 = vld [vmem:[#allocation8 + $0x60] sm:$0xf]
    %v2558 = vld [vmem:[#allocation8 + $0x64] sm:$0xf]
    %v2559 = vld [vmem:[#allocation8 + $0x68] sm:$0xf]
    %v2560 = vld [vmem:[#allocation8 + $0x6c] sm:$0xf]
    %v2561 = vld [vmem:[#allocation8 + $0x70] sm:$0xf]
    %v2562 = vld [vmem:[#allocation8 + $0x74] sm:$0xf]
    %v2563 = vld [vmem:[#allocation8 + $0x78] sm:$0xf]
    %v2564 = vld [vmem:[#allocation8 + $0x7c] sm:$0xf]
    %v2565 = vld [vmem:[%s10] sm:$0x1]
    %v2567 = vlaneseq
    %v2568 = vshrl.u32 %v2567, 7
    %v2569 = vsub.s32 0, %v2568
    %v2570 = vrot.slane %v2565, %v2569
    %v2604 = vunpack.c.l.b16 %v2533
    %v2605 = vunpack.c.l.b16 %v2534
    %v2606 = vunpack.c.l.b16 %v2535
    %v2607 = vunpack.c.l.b16 %v2536
    %v2608 = vunpack.c.l.b16 %v2537
    %v2609 = vunpack.c.l.b16 %v2538
    %v2610 = vunpack.c.l.b16 %v2539
    %v2611 = vunpack.c.l.b16 %v2540
    %v2612 = vunpack.c.l.b16 %v2541
    %v2613 = vunpack.c.l.b16 %v2542
    %v2614 = vunpack.c.l.b16 %v2543
    %v2615 = vunpack.c.l.b16 %v2544
    %v2616 = vunpack.c.l.b16 %v2545
    %v2617 = vunpack.c.l.b16 %v2546
    %v2618 = vunpack.c.l.b16 %v2547
    %v2619 = vunpack.c.l.b16 %v2548
    %v2620 = vunpack.c.l.b16 %v2549
    %v2621 = vunpack.c.l.b16 %v2550
    %v2622 = vunpack.c.l.b16 %v2551
    %v2623 = vunpack.c.l.b16 %v2552
    %v2624 = vunpack.c.l.b16 %v2553
    %v2625 = vunpack.c.l.b16 %v2554
    %v2626 = vunpack.c.l.b16 %v2555
    %v2627 = vunpack.c.l.b16 %v2556
    %v2628 = vunpack.c.l.b16 %v2557
    %v2629 = vunpack.c.l.b16 %v2558
    %v2630 = vunpack.c.l.b16 %v2559
    %v2631 = vunpack.c.l.b16 %v2560
    %v2632 = vunpack.c.l.b16 %v2561
    %v2633 = vunpack.c.l.b16 %v2562
    %v2634 = vunpack.c.l.b16 %v2563
    %v2635 = vunpack.c.l.b16 %v2564
    %v2636 = vpack.c.b16 %v2605, %v2604
    %v2637 = vpack.c.b16 %v2607, %v2606
    %v2638 = vpack.c.b16 %v2609, %v2608
    %v2639 = vpack.c.b16 %v2611, %v2610
    %v2640 = vpack.c.b16 %v2613, %v2612
    %v2641 = vpack.c.b16 %v2615, %v2614
    %v2642 = vpack.c.b16 %v2617, %v2616
    %v2643 = vpack.c.b16 %v2619, %v2618
    %v2644 = vpack.c.b16 %v2621, %v2620
    %v2645 = vpack.c.b16 %v2623, %v2622
    %v2646 = vpack.c.b16 %v2625, %v2624
    %v2647 = vpack.c.b16 %v2627, %v2626
    %v2648 = vpack.c.b16 %v2629, %v2628
    %v2649 = vpack.c.b16 %v2631, %v2630
    %v2650 = vpack.c.b16 %v2633, %v2632
    %v2651 = vpack.c.b16 %v2635, %v2634
    %2668 = vmatprep.subr.bf16.mxu0 0
    %2669 = vmatpush1.bf16.msra.mxu0 %v2636
    %2670 = vmatprep.subr.bf16.mxu0 0
    %2671 = vmatpush1.bf16.msra.mxu0 %v2637
    %2672 = vmatprep.subr.bf16.mxu0 0
    %2673 = vmatpush1.bf16.msra.mxu0 %v2638
    %2674 = vmatprep.subr.bf16.mxu0 0
    %2675 = vmatpush1.bf16.msra.mxu0 %v2639
    %2676 = vmatprep.subr.bf16.mxu0 0
    %2677 = vmatpush1.bf16.msra.mxu0 %v2640
    %2678 = vmatprep.subr.bf16.mxu0 0
    %2679 = vmatpush1.bf16.msra.mxu0 %v2641
    %2680 = vmatprep.subr.bf16.mxu0 0
    %2681 = vmatpush1.bf16.msra.mxu0 %v2642
    %2682 = vmatprep.subr.bf16.mxu0 0
    %2683 = vmatpush1.bf16.msra.mxu0 %v2643
    %2684 = vmatprep.subr.bf16.mxu0 0
    %2685 = vmatpush1.bf16.msra.mxu0 %v2644
    %2686 = vmatprep.subr.bf16.mxu0 0
    %2687 = vmatpush1.bf16.msra.mxu0 %v2645
    %2688 = vmatprep.subr.bf16.mxu0 0
    %2689 = vmatpush1.bf16.msra.mxu0 %v2646
    %2690 = vmatprep.subr.bf16.mxu0 0
    %2691 = vmatpush1.bf16.msra.mxu0 %v2647
    %2692 = vmatprep.subr.bf16.mxu0 0
    %2693 = vmatpush1.bf16.msra.mxu0 %v2648
    %2694 = vmatprep.subr.bf16.mxu0 0
    %2695 = vmatpush1.bf16.msra.mxu0 %v2649
    %2696 = vmatprep.subr.bf16.mxu0 0
    %2697 = vmatpush1.bf16.msra.mxu0 %v2650
    %2698 = vmatprep.subr.bf16.mxu0 0
    %2699 = vmatpush1.bf16.msra.mxu0 %v2651
    %2700 = vmatprep.mubr.bf16.mxu0 %v2508
    %2701 = vmatmul.mubr.bf16.gmra.mrb[0].mxu0 %v2507
    %v2702 = vpop.f32.mrb[0].mxu0
    %v2703 = vadd.f32 %v2570, %v2702
    %v2704 = vpop.f32.mrb[0].mxu0
    %v2705 = vpop.f32.mrb[0].mxu0
    %v2706 = vadd.f32 %v2570, %v2705
    %v2707 = vpop.f32.mrb[0].mxu0
    %2708 = vmatprep.mubr.bf16.mxu0 %v2510
    %2709 = vmatmul.mubr.bf16.gmra.mrb[0].mxu0 %v2509
    %v2710 = vpop.f32.mrb[0].mxu0
    %v2711 = vadd.f32 %v2570, %v2710
    %v2712 = vpop.f32.mrb[0].mxu0
    %v2713 = vpop.f32.mrb[0].mxu0
    %v2714 = vadd.f32 %v2570, %v2713
    %v2715 = vpop.f32.mrb[0].mxu0
    %2716 = vmatprep.mubr.bf16.mxu0 %v2512
    %2717 = vmatmul.mubr.bf16.gmra.mrb[0].mxu0 %v2511
    %v2718 = vpop.f32.mrb[0].mxu0
    %v2719 = vadd.f32 %v2570, %v2718
    %v2720 = vpop.f32.mrb[0].mxu0
    %v2721 = vpop.f32.mrb[0].mxu0
    %v2722 = vadd.f32 %v2570, %v2721
    %v2723 = vpop.f32.mrb[0].mxu0
    %2724 = vmatprep.mubr.bf16.mxu0 %v2514
    %2725 = vmatmul.mubr.bf16.gmra.mrb[0].mxu0 %v2513
    %v2726 = vpop.f32.mrb[0].mxu0
    %v2727 = vadd.f32 %v2570, %v2726
    %v2728 = vpop.f32.mrb[0].mxu0
    %v2729 = vpop.f32.mrb[0].mxu0
    %v2730 = vadd.f32 %v2570, %v2729
    %v2731 = vpop.f32.mrb[0].mxu0
    %2732 = vmatprep.mubr.bf16.mxu0 %v2516
    %2733 = vmatmul.mubr.bf16.gmra.mrb[0].mxu0 %v2515
    %v2734 = vpop.f32.mrb[0].mxu0
    %v2735 = vadd.f32 %v2570, %v2734
    %v2736 = vpop.f32.mrb[0].mxu0
    %v2737 = vpop.f32.mrb[0].mxu0
    %v2738 = vadd.f32 %v2570, %v2737
    %v2739 = vpop.f32.mrb[0].mxu0
    %2740 = vmatprep.mubr.bf16.mxu0 %v2518
    %2741 = vmatmul.mubr.bf16.gmra.mrb[0].mxu0 %v2517
    %v2742 = vpop.f32.mrb[0].mxu0
    %v2743 = vadd.f32 %v2570, %v2742
    %v2744 = vpop.f32.mrb[0].mxu0
    %v2745 = vpop.f32.mrb[0].mxu0
    %v2746 = vadd.f32 %v2570, %v2745
    %v2747 = vpop.f32.mrb[0].mxu0
    %2748 = vmatprep.mubr.bf16.mxu0 %v2520
    %2749 = vmatmul.mubr.bf16.gmra.mrb[0].mxu0 %v2519
    %v2750 = vpop.f32.mrb[0].mxu0
    %v2751 = vadd.f32 %v2570, %v2750
    %v2752 = vpop.f32.mrb[0].mxu0
    %v2753 = vpop.f32.mrb[0].mxu0
    %v2754 = vadd.f32 %v2570, %v2753
    %v2755 = vpop.f32.mrb[0].mxu0
    %2756 = vmatprep.mubr.bf16.mxu0 %v2522
    %2757 = vmatmul.mubr.bf16.gmra.mrb[0].mxu0 %v2521
    %v2758 = vpop.f32.mrb[0].mxu0
    %v2759 = vadd.f32 %v2570, %v2758
    %v2760 = vpop.f32.mrb[0].mxu0
    %v2761 = vpop.f32.mrb[0].mxu0
    %v2762 = vadd.f32 %v2570, %v2761
    %v2763 = vpop.f32.mrb[0].mxu0
    %2764 = vmatprep.mubr.bf16.mxu0 %v2524
    %2765 = vmatmul.mubr.bf16.gmra.mrb[0].mxu0 %v2523
    %v2766 = vpop.f32.mrb[0].mxu0
    %v2767 = vadd.f32 %v2570, %v2766
    %v2768 = vpop.f32.mrb[0].mxu0
    %v2769 = vpop.f32.mrb[0].mxu0
    %v2770 = vadd.f32 %v2570, %v2769
    %v2771 = vpop.f32.mrb[0].mxu0
    %2772 = vmatprep.mubr.bf16.mxu0 %v2526
    %2773 = vmatmul.mubr.bf16.gmra.mrb[0].mxu0 %v2525
    %v2774 = vpop.f32.mrb[0].mxu0
    %v2775 = vadd.f32 %v2570, %v2774
    %v2776 = vpop.f32.mrb[0].mxu0
    %v2777 = vpop.f32.mrb[0].mxu0
    %v2778 = vadd.f32 %v2570, %v2777
    %v2779 = vpop.f32.mrb[0].mxu0
    %2780 = vmatprep.mubr.bf16.mxu0 %v2528
    %2781 = vmatmul.mubr.bf16.gmra.mrb[0].mxu0 %v2527
    %v2782 = vpop.f32.mrb[0].mxu0
    %v2783 = vadd.f32 %v2570, %v2782
    %v2784 = vpop.f32.mrb[0].mxu0
    %v2785 = vpop.f32.mrb[0].mxu0
    %v2786 = vadd.f32 %v2570, %v2785
    %v2787 = vpop.f32.mrb[0].mxu0
    %2788 = vmatprep.mubr.bf16.mxu0 %v2530
    %2789 = vmatmul.mubr.bf16.gmra.mrb[0].mxu0 %v2529
    %v2790 = vpop.f32.mrb[0].mxu0
    %v2791 = vadd.f32 %v2570, %v2790
    %v2792 = vpop.f32.mrb[0].mxu0
    %v2793 = vpop.f32.mrb[0].mxu0
    %v2794 = vadd.f32 %v2570, %v2793
    %v2795 = vpop.f32.mrb[0].mxu0
    %2796 = vmatprep.mubr.bf16.mxu0 %v2532
    %2797 = vmatmul.mubr.bf16.gmra.mrb[0].mxu0 %v2531
    %v2798 = vpop.f32.mrb[0].mxu0
    %v2799 = vadd.f32 %v2570, %v2798
    %v2800 = vpop.f32.mrb[0].mxu0
    %v2801 = vpop.f32.mrb[0].mxu0
    %v2802 = vadd.f32 %v2570, %v2801
    %v2803 = vpop.f32.mrb[0].mxu0
    %2804 = vdwg.mxu0
    %v2805 = vpack.c.bf16 %v2706, %v2703
    %v2806 = vpack.c.bf16 %v2714, %v2711
    %v2807 = vpack.c.bf16 %v2722, %v2719
    %v2808 = vpack.c.bf16 %v2730, %v2727
    %v2809 = vpack.c.bf16 %v2738, %v2735
    %v2810 = vpack.c.bf16 %v2746, %v2743
    %v2811 = vpack.c.bf16 %v2754, %v2751
    %v2812 = vpack.c.bf16 %v2762, %v2759
    %v2813 = vpack.c.bf16 %v2770, %v2767
    %v2814 = vpack.c.bf16 %v2778, %v2775
    %v2815 = vpack.c.bf16 %v2786, %v2783
    %v2816 = vpack.c.bf16 %v2794, %v2791
    %v2817 = vpack.c.bf16 %v2802, %v2799
    %v2831 = vunpack.c.l.b16 %v2805
    %v2832 = vunpack.c.h.b16 %v2805
    %v2833 = vunpack.c.l.b16 %v2806
    %v2834 = vunpack.c.h.b16 %v2806
    %v2835 = vunpack.c.l.b16 %v2807
    %v2836 = vunpack.c.h.b16 %v2807
    %v2837 = vunpack.c.l.b16 %v2808
    %v2838 = vunpack.c.h.b16 %v2808
    %v2839 = vunpack.c.l.b16 %v2809
    %v2840 = vunpack.c.h.b16 %v2809
    %v2841 = vunpack.c.l.b16 %v2810
    %v2842 = vunpack.c.h.b16 %v2810
    %v2843 = vunpack.c.l.b16 %v2811
    %v2844 = vunpack.c.h.b16 %v2811
    %v2845 = vunpack.c.l.b16 %v2812
    %v2846 = vunpack.c.h.b16 %v2812
    %v2847 = vunpack.c.l.b16 %v2813
    %v2848 = vunpack.c.h.b16 %v2813
    %v2849 = vunpack.c.l.b16 %v2814
    %v2850 = vunpack.c.h.b16 %v2814
    %v2851 = vunpack.c.l.b16 %v2815
    %v2852 = vunpack.c.h.b16 %v2815
    %v2853 = vunpack.c.l.b16 %v2816
    %v2854 = vunpack.c.h.b16 %v2816
    %v2855 = vunpack.c.l.b16 %v2817
    %v2856 = vunpack.c.h.b16 %v2817
    %v2857 = vpack.c.b16 %v2831, %v2831
    %v2858 = vpack.c.b16 %v2832, %v2832
    %v2859 = vpack.c.b16 %v2833, %v2833
    %v2860 = vpack.c.b16 %v2834, %v2834
    %v2861 = vpack.c.b16 %v2835, %v2835
    %v2862 = vpack.c.b16 %v2836, %v2836
    %v2863 = vpack.c.b16 %v2837, %v2837
    %v2864 = vpack.c.b16 %v2838, %v2838
    %v2865 = vpack.c.b16 %v2839, %v2839
    %v2866 = vpack.c.b16 %v2840, %v2840
    %v2867 = vpack.c.b16 %v2841, %v2841
    %v2868 = vpack.c.b16 %v2842, %v2842
    %v2869 = vpack.c.b16 %v2843, %v2843
    %v2870 = vpack.c.b16 %v2844, %v2844
    %v2871 = vpack.c.b16 %v2845, %v2845
    %v2872 = vpack.c.b16 %v2846, %v2846
    %v2873 = vpack.c.b16 %v2847, %v2847
    %v2874 = vpack.c.b16 %v2848, %v2848
    %v2875 = vpack.c.b16 %v2849, %v2849
    %v2876 = vpack.c.b16 %v2850, %v2850
    %v2877 = vpack.c.b16 %v2851, %v2851
    %v2878 = vpack.c.b16 %v2852, %v2852
    %v2879 = vpack.c.b16 %v2853, %v2853
    %v2880 = vpack.c.b16 %v2854, %v2854
    %v2881 = vpack.c.b16 %v2855, %v2855
    %v2882 = vpack.c.b16 %v2856, %v2856
    %2909 = vst [vmem:[#allocation9] sm:$0xf] %v2857
    %2910 = vst [vmem:[#allocation9 + $0x4] sm:$0xf] %v2858
    %2911 = vst [vmem:[#allocation9 + $0x8] sm:$0xf] %v2859
    %2912 = vst [vmem:[#allocation9 + $0xc] sm:$0xf] %v2860
    %2913 = vst [vmem:[#allocation9 + $0x10] sm:$0xf] %v2861
    %2914 = vst [vmem:[#allocation9 + $0x14] sm:$0xf] %v2862
    %2915 = vst [vmem:[#allocation9 + $0x18] sm:$0xf] %v2863
    %2916 = vst [vmem:[#allocation9 + $0x1c] sm:$0xf] %v2864
    %2917 = vst [vmem:[#allocation9 + $0x20] sm:$0xf] %v2865
    %2918 = vst [vmem:[#allocation9 + $0x24] sm:$0xf] %v2866
    %2919 = vst [vmem:[#allocation9 + $0x28] sm:$0xf] %v2867
    %2920 = vst [vmem:[#allocation9 + $0x2c] sm:$0xf] %v2868
    %2921 = vst [vmem:[#allocation9 + $0x30] sm:$0xf] %v2869
    %2922 = vst [vmem:[#allocation9 + $0x34] sm:$0xf] %v2870
    %2923 = vst [vmem:[#allocation9 + $0x38] sm:$0xf] %v2871
    %2924 = vst [vmem:[#allocation9 + $0x3c] sm:$0xf] %v2872
    %2925 = vst [vmem:[#allocation9 + $0x40] sm:$0xf] %v2873
    %2926 = vst [vmem:[#allocation9 + $0x44] sm:$0xf] %v2874
    %2927 = vst [vmem:[#allocation9 + $0x48] sm:$0xf] %v2875
    %2928 = vst [vmem:[#allocation9 + $0x4c] sm:$0xf] %v2876
    %2929 = vst [vmem:[#allocation9 + $0x50] sm:$0xf] %v2877
    %2930 = vst [vmem:[#allocation9 + $0x54] sm:$0xf] %v2878
    %2931 = vst [vmem:[#allocation9 + $0x58] sm:$0xf] %v2879
    %2932 = vst [vmem:[#allocation9 + $0x5c] sm:$0xf] %v2880
    %2933 = vst [vmem:[#allocation9 + $0x60] sm:$0xf] %v2881
    %2934 = vst [vmem:[#allocation9 + $0x64] sm:$0xf] %v2882
    // Predicated region
    $region58: #{tpu_custom_call.1} parent=1 // pred_check
      _
    $region59: #{tpu_custom_call.1} parent=1 // pred_check_branch
      %2936 = sbr.rel (0) target = $region61
    $region60: #{tpu_custom_call.1} parent=1 // pred_region
      %s2938 = ssub.s32 1664, 1664
      %2939 = vsyncadd [#allocation5], %s2938
      %s2940 = sshll.u32 [#allocation9], 4
      %s2941 = int_to_ptr.vmem [resolvable:$true] %s2940
      %2946 = dma.vmem_to_hbm [thread:$0]  %s2941, 1664, %s11, [#allocation5], 64, 64, 4
    $region61: #{tpu_custom_call.1} parent=1 // pred_fallthru
      _
    // Predicated region
    $region62: #{tpu_custom_call.1} parent=1 // pred_check
      _
    $region63: #{tpu_custom_call.1} parent=1 // pred_check_branch
      %2948 = sbr.rel (0) target = $region65
    $region64: #{tpu_custom_call.1} parent=1 // pred_region
      %2949 = dma.done [#allocation5], 1664
    $region65: #{tpu_custom_call.1} parent=1 // pred_fallthru
      _
    %2950 = vsyncpa [#allocation4], 1
    %2951 = vsyncpa [#allocation7], 1
    %2952 = vsyncpa [#allocation5], 1

</llo_original>
